<compile_context>
chip_gen: v7x
topology: tpu7x:2x2x1
jax: 0.10.0
libtpu: 0.0.40
codegen_flags: <defaults>
</compile_context>

<pallas_src>
import functools
import math

import jax
import jax.numpy as jnp
from jax.experimental import pallas as pl
from jax.experimental.pallas import tpu as pltpu

LN_EPS = 1e-5  # PyTorch nn.LayerNorm default


# ----------------------------------------------------------------------------------------------
# Capability / hardware probes.  These are isolated from the production pallas_call so genuine
# lowering or shape errors in the real kernel are never silently swallowed.
# ----------------------------------------------------------------------------------------------
@functools.lru_cache(maxsize=1)
def _vmem_capacity_bytes():
    try:
        cap = getattr(pltpu.get_tpu_info(), "vmem_capacity_bytes", None)
        if cap:
            return int(cap)
    except Exception:  # noqa: BLE001 - hardware-query probe only
        pass
    return 64 * 2**20  # conservative default = v7x per-TensorCore VMEM


@functools.lru_cache(maxsize=1)
def _single_buffering_ok():
    """Compile + run a tiny probe kernel to check pipeline_mode=pl.Buffered(1) support."""
    if not hasattr(pl, "Buffered"):
        return False

    def body(a_ref, b_ref, o_ref):
        o_ref[...] = a_ref[...] + b_ref[...]

    a = jnp.full((8, 128), 1.0, jnp.float32)
    b = jnp.arange(16 * 128, dtype=jnp.float32).reshape(16, 128)
    try:
        out = pl.pallas_call(
            body,
            out_shape=jax.ShapeDtypeStruct((16, 128), jnp.float32),
            grid=(2,),
            in_specs=[
                pl.BlockSpec((8, 128), lambda i: (0, 0), pipeline_mode=pl.Buffered(1)),
                pl.BlockSpec((8, 128), lambda i: (i, 0), pipeline_mode=pl.Buffered(1)),
            ],
            out_specs=pl.BlockSpec((8, 128), lambda i: (i, 0)),
        )(a, b)
        expected = b + jnp.concatenate([a, a], axis=0)
        return bool(jnp.allclose(out, expected))
    except Exception:  # noqa: BLE001 - isolated capability probe, not the production call
        return False


# ----------------------------------------------------------------------------------------------
# Kernel
# ----------------------------------------------------------------------------------------------
def _encoder_layer_kernel(
    xq_ref,                          # (1, TQ, D)  query-row tile of x
    xkv_ref,                         # (1, S,  D)  full sequence (for K/V; read only at qt==0)
    g1_ref, b1_ref,                  # norm_1 gamma/beta      (1, D)    f32
    wq_ref, bq_ref,                  # q projection           (D, D) bf16, (1, D) f32
    wk_ref, bk_ref,                  # k projection
    wv_ref, bv_ref,                  # v projection
    wo_ref, bo_ref,                  # output projection
    g2_ref, b2_ref,                  # norm_2 gamma/beta      (1, D)    f32
    w1_ref, c1_ref,                  # ff linear_1            (D, Dff) bf16, (1, Dff) f32
    w2_ref, c2_ref,                  # ff linear_2            (Dff, D) bf16, (1, D)   f32
    o_ref,                           # (1, TQ, D)
    k_ref,                           # scratch (S, D)  bf16   K cache (per batch)
    v_ref,                           # scratch (S, D)  bf16   V cache (per batch)
    ctx_ref,                         # scratch (TQ, D) bf16   per-head context slab
    *, num_heads: int, ff_tile: int,
):
    TQ = xq_ref.shape[1]
    D = xq_ref.shape[2]
    dk = D // num_heads
    scale = 1.0 / math.sqrt(dk)

    def layer_norm(t, g_ref, b_ref):         # f32 in / f32 out (VPU + EUP rsqrt)
        mu = jnp.mean(t, axis=-1, keepdims=True)
        var = jnp.mean((t - mu) * (t - mu), axis=-1, keepdims=True)
        return (t - mu) * jax.lax.rsqrt(var + LN_EPS) * g_ref[...] + b_ref[...]

    def project(t_bf16, w_ref, b_ref):        # bf16 matmul, f32 accumulate, f32 bias
        return jnp.dot(t_bf16, w_ref[...], preferred_element_type=jnp.float32) + b_ref[...]

    # ---- per-batch setup: compute K/V once (first query tile of each batch) ----
    @pl.when(pl.program_id(1) == 0)
    def _kv_setup():
        xkv = xkv_ref[0].astype(jnp.float32)                          # (S, D)
        ln1_kv = layer_norm(xkv, g1_ref, b1_ref).astype(jnp.bfloat16)  # cast once for both proj
        k_ref[...] = project(ln1_kv, wk_ref, bk_ref).astype(jnp.bfloat16)
        v_ref[...] = project(ln1_kv, wv_ref, bv_ref).astype(jnp.bfloat16)

    # ---- sublayer 1: multi-head self-attention for this query tile ----
    xq = xq_ref[0].astype(jnp.float32)                                # (TQ, D)
    ln1_q = layer_norm(xq, g1_ref, b1_ref).astype(jnp.bfloat16)
    q = project(ln1_q, wq_ref, bq_ref).astype(jnp.bfloat16)           # (TQ, D)

    for h in range(num_heads):                                        # static unroll over heads
        lo, hi = h * dk, (h + 1) * dk
        # Contract the last dims of q and K (no explicit XLU transpose).
        scores = jnp.einsum("qd,kd->qk", q[:, lo:hi], k_ref[:, lo:hi],
                            preferred_element_type=jnp.float32) * scale
        scores = scores - jnp.max(scores, axis=-1, keepdims=True)
        p = jnp.exp(scores)
        # approx reciprocal runs on the EUP slot (off the VALU path); small relative error vs
        # an exact divide -- acceptable given bf16 matmul activations.
        p = p * pl.reciprocal(jnp.sum(p, axis=-1, keepdims=True), approx=True)
        ctx_ref[:, lo:hi] = jnp.dot(p.astype(jnp.bfloat16), v_ref[:, lo:hi],
                                    preferred_element_type=jnp.float32).astype(jnp.bfloat16)

    # One full-D output projection (keeps the MXU contraction deep even for small dk).
    attn = jnp.dot(ctx_ref[...], wo_ref[...],
                   preferred_element_type=jnp.float32) + bo_ref[...]
    x1 = xq + attn                               # residual (dropout_1 = identity, p=0.0)

    # ---- sublayer 2: position-wise feed-forward on norm_2(x1), chunked over Dff ----
    ln2 = layer_norm(x1, g2_ref, b2_ref).astype(jnp.bfloat16)
    Dff = w1_ref.shape[1]
    ff = jnp.zeros((TQ, D), jnp.float32)
    for lo in range(0, Dff, ff_tile):            # static unroll over Dff chunks
        hi = min(lo + ff_tile, Dff)
        h1 = jnp.maximum(
            jnp.dot(ln2, w1_ref[:, lo:hi], preferred_element_type=jnp.float32)
            + c1_ref[:, lo:hi], 0.0)             # ReLU, (TQ, chunk)
        ff = ff + jnp.dot(h1.astype(jnp.bfloat16), w2_ref[lo:hi, :],
                          preferred_element_type=jnp.float32)
    ff = ff + c2_ref[...]

    o_ref[0] = (x1 + ff).astype(o_ref.dtype)     # residual (dropout_2 = identity)


# ----------------------------------------------------------------------------------------------
# Wrapper
# ----------------------------------------------------------------------------------------------
def _pick_tile(n, candidates):
    for c in candidates:
        if c <= n and n % c == 0:
            return c
    return n


def _make_specs(x_shape, plist, TQ, single_buffer):
    B, S, D = x_shape
    xq_spec = pl.BlockSpec((1, TQ, D), lambda b, qt: (b, qt, 0))
    out_spec = pl.BlockSpec((1, TQ, D), lambda b, qt: (b, qt, 0))
    kv_idx = lambda b, qt: (b, 0, 0)             # constant within a batch -> no re-DMA per qt

    if single_buffer:
        # Constant-per-batch blocks: one resident buffer is enough.  Recovers one S*D*4 copy of
        # x and one copy of every weight in VMEM (biggest help on v7x's 64 MiB).
        xkv_spec = pl.BlockSpec((1, S, D), kv_idx, pipeline_mode=pl.Buffered(1))

        def weight_spec(p):
            return pl.BlockSpec(p.shape, lambda b, qt, _nd=p.ndim: (0,) * _nd,
                                pipeline_mode=pl.Buffered(1))
    else:
        xkv_spec = pl.BlockSpec((1, S, D), kv_idx)

        def weight_spec(p):
            return pl.BlockSpec(p.shape, lambda b, qt, _nd=p.ndim: (0,) * _nd)

    in_specs = [xq_spec, xkv_spec] + [weight_spec(p) for p in plist]
    return in_specs, out_spec


def _vmem_limit_bytes(plist, S, D, Dff, TQ, ff_tile, single_buffer, cap):
    wbuf = 1 if single_buffer else 2
    weight_bytes = wbuf * sum(int(p.size) * p.dtype.itemsize for p in plist)
    xkv_bytes = (1 if single_buffer else 2) * S * D * 4
    io_tiles = 2 * (TQ * D * 4) * 2                  # double-buffered xq in + o out
    scratch = 2 * (2 * S * D + TQ * D)               # bf16 K/V caches + head-context slab
    setup_act = 4 * S * D * 4                        # xkv f32, ln1_kv, K/V f32 results (qt==0)
    step_act = (6 * TQ * D * 4                       # xq / ln1_q / q / attn / x1 / ff (f32)
                + 3 * TQ * S * 4                     # scores / exp / probabilities
                + TQ * ff_tile * 4                   # FF hidden chunk
                + 4 * TQ * D * 2)                    # bf16 temporaries
    need = weight_bytes + xkv_bytes + io_tiles + scratch + max(setup_act, step_act)
    limit = max(int(1.3 * need), 32 * 2**20)         # fudge for padding / compiler scratch
    return min(limit, int(0.85 * cap))               # never request all of physical VMEM


def _encoder_layer_call(x, plist, num_heads, TQ, ff_tile, single_buffer):
    B, S, D = x.shape
    Dff = plist[12].shape[1]                         # w1 is plist[12]
    kernel = functools.partial(_encoder_layer_kernel, num_heads=num_heads, ff_tile=ff_tile)
    in_specs, out_specs = _make_specs(x.shape, plist, TQ, single_buffer)
    cap = _vmem_capacity_bytes()
    vmem_limit = _vmem_limit_bytes(plist, S, D, Dff, TQ, ff_tile, single_buffer, cap)

    return pl.pallas_call(
        kernel,
        out_shape=jax.ShapeDtypeStruct((B, S, D), x.dtype),
        grid_spec=pltpu.PrefetchScalarGridSpec(
            num_scalar_prefetch=0,
            grid=(B, S // TQ),
            in_specs=in_specs,
            out_specs=out_specs,
            scratch_shapes=[
                pltpu.VMEM((S, D), jnp.bfloat16),    # K cache (per batch)
                pltpu.VMEM((S, D), jnp.bfloat16),    # V cache (per batch)
                pltpu.VMEM((TQ, D), jnp.bfloat16),   # per-head context slab
            ],
        ),
        compiler_params=pltpu.CompilerParams(
            # Batch axis is parallel (megacore); the query-tile axis must be sequential because
            # the K/V scratch is filled at qt==0 and reused by later tiles of the same batch.
            dimension_semantics=("parallel", "arbitrary"),
            vmem_limit_bytes=vmem_limit,
        ),
    )(x, x, *plist)


def encoder_layer(x, params, num_heads=1):
    """x: (B, S, D) float32. params: dict produced by init_params."""
    B, S, D = x.shape
    assert D % num_heads == 0, "model_dim must be divisible by num_heads"
    order = ["g1", "b1", "wq", "bq", "wk", "bk", "wv", "bv", "wo", "bo",
             "g2", "b2", "w1", "c1", "w2", "c2"]
    plist = [params[k] for k in order]
    Dff = params["w1"].shape[1]

    cap = _vmem_capacity_bytes()
    # v5e/v6e have 128 MiB VMEM -> allow larger query tiles; v7x (64 MiB) stays <= 256.
    if cap >= 96 * 2**20:
        tq_candidates = (512, 256, 128, 64, 32, 16, 8)
    else:
        tq_candidates = (256, 128, 64, 32, 16, 8)
    TQ = _pick_tile(S, tq_candidates)                # query-row tile (multiple of 8)
    ff_tile = _pick_tile(Dff, (2048, 1024, 512, 256, 128))

    single_buffer = _single_buffering_ok()           # probed once, outside the real kernel
    return _encoder_layer_call(x, plist, num_heads, TQ, ff_tile, single_buffer)


def init_params(key, model_dim, d_ff):
    """Deterministic synthetic init (shapes follow the PyTorch module); matmul weights in bf16."""
    D, Dff = model_dim, d_ff
    ks = jax.random.split(key, 6)
    s = 0.02

    def w(k, shape):
        return (s * jax.random.normal(k, shape, jnp.float32)).astype(jnp.bfloat16)

    return {
        # norm_1 / norm_2 (PyTorch LayerNorm init: weight=1, bias=0); kept f32
        "g1": jnp.ones((1, D), jnp.float32),  "b1": jnp.zeros((1, D), jnp.float32),
        "g2": jnp.ones((1, D), jnp.float32),  "b2": jnp.zeros((1, D), jnp.float32),
        # attention q/k/v/out projections (weights stored (in, out), bf16; biases f32)
        "wq": w(ks[0], (D, D)), "bq": jnp.zeros((1, D), jnp.float32),
        "wk": w(ks[1], (D, D)), "bk": jnp.zeros((1, D), jnp.float32),
        "wv": w(ks[2], (D, D)), "bv": jnp.zeros((1, D), jnp.float32),
        "wo": w(ks[3], (D, D)), "bo": jnp.zeros((1, D), jnp.float32),
        # feed-forward
        "w1": w(ks[4], (D, Dff)), "c1": jnp.zeros((1, Dff), jnp.float32),
        "w2": w(ks[5], (Dff, D)), "c2": jnp.zeros((1, D), jnp.float32),
    }


def _encoder_layer_reference(x, params, num_heads):
    """Pure-JAX reference (f32 everywhere, weights upcast) for a correctness check."""
    def ln(v, g, b):
        mu = v.mean(-1, keepdims=True)
        var = ((v - mu) ** 2).mean(-1, keepdims=True)
        return (v - mu) / jnp.sqrt(var + LN_EPS) * g + b

    B, S, D = x.shape
    dk = D // num_heads
    f32 = lambda a: a.astype(jnp.float32)

    h = ln(x, params["g1"], params["b1"])
    q = h @ f32(params["wq"]) + params["bq"]
    k = h @ f32(params["wk"]) + params["bk"]
    v = h @ f32(params["wv"]) + params["bv"]
    qh = q.reshape(B, S, num_heads, dk).transpose(0, 2, 1, 3)
    kh = k.reshape(B, S, num_heads, dk).transpose(0, 2, 1, 3)
    vh = v.reshape(B, S, num_heads, dk).transpose(0, 2, 1, 3)
    s = jnp.einsum("bhqd,bhkd->bhqk", qh, kh) / math.sqrt(dk)
    p = jax.nn.softmax(s, axis=-1)
    ctx = jnp.einsum("bhqk,bhkd->bhqd", p, vh).transpose(0, 2, 1, 3).reshape(B, S, D)
    x1 = x + ctx @ f32(params["wo"]) + params["bo"]
    h2 = ln(x1, params["g2"], params["b2"])
    ff = jnp.maximum(h2 @ f32(params["w1"]) + params["c1"], 0.0)
    return x1 + ff @ f32(params["w2"]) + params["c2"]


if __name__ == "__main__":
    B, S, D = 2, 8, 32          # batch, seq, model_dim
    NUM_HEADS = 1               # module default
    D_FF = 4 * D                # TODO(synk): hidden width assumed 4*model_dim (not in snippet)

    key = jax.random.PRNGKey(0)
    kx, kp = jax.random.split(key)
    x = jax.random.normal(kx, (B, S, D), jnp.float32)
    params = init_params(kp, D, D_FF)

    out = encoder_layer(x, params, num_heads=NUM_HEADS)
    jax.block_until_ready(out)
    assert out.shape == (B, S, D) and out.dtype == jnp.float32

    ref = _encoder_layer_reference(x, params, NUM_HEADS)
    err = float(jnp.max(jnp.abs(out - ref)))
    assert err < 1e-1, f"kernel vs reference max abs error {err}"   # bf16-weight tolerance
    print("KERNEL_OK")
</pallas_src>

<mosaic_0001>
module attributes {stable_mosaic.version = 11 : i64} {
  func.func @body(%arg0: i32, %arg1: memref<8x128xf32, #tpu.memory_space<vmem>>, %arg2: memref<8x128xf32, #tpu.memory_space<vmem>>, %arg3: memref<8x128xf32, #tpu.memory_space<vmem>>) attributes {dimension_semantics = [#tpu.dimension_semantics<arbitrary>], iteration_bounds = array<i64: 2>, scalar_prefetch = 0 : i64, scratch_operands = 0 : i64, tpu.core_type = #tpu.core_type<tc>, window_params = [{pipeline_mode = #tpu.pipeline_mode<synchronous>, transform_indices = @transform_0, window_bounds = array<i64: 8, 128>}, {pipeline_mode = #tpu.pipeline_mode<synchronous>, transform_indices = @transform_1, window_bounds = array<i64: 8, 128>}, {transform_indices = @transform_2, window_bounds = array<i64: 8, 128>}]} {
    %c0 = arith.constant 0 : index
    %c0_0 = arith.constant 0 : index
    %0 = vector.load %arg1[%c0, %c0_0] : memref<8x128xf32, #tpu.memory_space<vmem>>, vector<8x128xf32>
    %c0_1 = arith.constant 0 : index
    %c0_2 = arith.constant 0 : index
    %1 = vector.load %arg2[%c0_1, %c0_2] : memref<8x128xf32, #tpu.memory_space<vmem>>, vector<8x128xf32>
    %2 = arith.addf %0, %1 : vector<8x128xf32>
    %c0_3 = arith.constant 0 : index
    %c0_4 = arith.constant 0 : index
    %3 = vector.load %arg3[%c0_3, %c0_4] : memref<8x128xf32, #tpu.memory_space<vmem>>, vector<8x128xf32>
    tpu.vector_store %arg3[%c0_3, %c0_4], %2 {strides = array<i32>} : memref<8x128xf32, #tpu.memory_space<vmem>>, vector<8x128xf32>,
    return
  }
  func.func @transform_0(%arg0: i32) -> (i32, i32) {
    %c0_i32 = arith.constant 0 : i32
    %c0_i32_0 = arith.constant 0 : i32
    %c0_i32_1 = arith.constant 0 : i32
    return %c0_i32, %c0_i32_0 : i32, i32
  }
  func.func @transform_1(%arg0: i32) -> (i32, i32) {
    %c0_i32 = arith.constant 0 : i32
    %c0_i32_0 = arith.constant 0 : i32
    return %arg0, %c0_i32 : i32, i32
  }
  func.func @transform_2(%arg0: i32) -> (i32, i32) {
    %c0_i32 = arith.constant 0 : i32
    %c0_i32_0 = arith.constant 0 : i32
    return %arg0, %c0_i32 : i32, i32
  }
}

module attributes {stable_mosaic.version = 11 : i64} {
  func.func @_encoder_layer_kernel(%arg0: i32, %arg1: i32, %arg2: memref<1x8x32xf32, #tpu.memory_space<vmem>>, %arg3: memref<1x8x32xf32, #tpu.memory_space<vmem>>, %arg4: memref<1x32xf32, #tpu.memory_space<vmem>>, %arg5: memref<1x32xf32, #tpu.memory_space<vmem>>, %arg6: memref<32x32xbf16, #tpu.memory_space<vmem>>, %arg7: memref<1x32xf32, #tpu.memory_space<vmem>>, %arg8: memref<32x32xbf16, #tpu.memory_space<vmem>>, %arg9: memref<1x32xf32, #tpu.memory_space<vmem>>, %arg10: memref<32x32xbf16, #tpu.memory_space<vmem>>, %arg11: memref<1x32xf32, #tpu.memory_space<vmem>>, %arg12: memref<32x32xbf16, #tpu.memory_space<vmem>>, %arg13: memref<1x32xf32, #tpu.memory_space<vmem>>, %arg14: memref<1x32xf32, #tpu.memory_space<vmem>>, %arg15: memref<1x32xf32, #tpu.memory_space<vmem>>, %arg16: memref<32x128xbf16, #tpu.memory_space<vmem>>, %arg17: memref<1x128xf32, #tpu.memory_space<vmem>>, %arg18: memref<128x32xbf16, #tpu.memory_space<vmem>>, %arg19: memref<1x32xf32, #tpu.memory_space<vmem>>, %arg20: memref<1x8x32xf32, #tpu.memory_space<vmem>>, %arg21: memref<8x32xbf16, #tpu.memory_space<vmem>>, %arg22: memref<8x32xbf16, #tpu.memory_space<vmem>>, %arg23: memref<8x32xbf16, #tpu.memory_space<vmem>>) attributes {dimension_semantics = [#tpu.dimension_semantics<parallel>, #tpu.dimension_semantics<arbitrary>], iteration_bounds = array<i64: 2, 1>, scalar_prefetch = 0 : i64, scratch_operands = 3 : i64, tpu.core_type = #tpu.core_type<tc>, window_params = [{transform_indices = @transform_0, window_bounds = array<i64: 1, 8, 32>}, {transform_indices = @transform_1, window_bounds = array<i64: 1, 8, 32>}, {pipeline_mode = #tpu.pipeline_mode<synchronous>, transform_indices = @transform_2, window_bounds = array<i64: 1, 32>}, {pipeline_mode = #tpu.pipeline_mode<synchronous>, transform_indices = @transform_3, window_bounds = array<i64: 1, 32>}, {pipeline_mode = #tpu.pipeline_mode<synchronous>, transform_indices = @transform_4, window_bounds = array<i64: 32, 32>}, {pipeline_mode = #tpu.pipeline_mode<synchronous>, transform_indices = @transform_5, window_bounds = array<i64: 1, 32>}, {pipeline_mode = #tpu.pipeline_mode<synchronous>, transform_indices = @transform_6, window_bounds = array<i64: 32, 32>}, {pipeline_mode = #tpu.pipeline_mode<synchronous>, transform_indices = @transform_7, window_bounds = array<i64: 1, 32>}, {pipeline_mode = #tpu.pipeline_mode<synchronous>, transform_indices = @transform_8, window_bounds = array<i64: 32, 32>}, {pipeline_mode = #tpu.pipeline_mode<synchronous>, transform_indices = @transform_9, window_bounds = array<i64: 1, 32>}, {pipeline_mode = #tpu.pipeline_mode<synchronous>, transform_indices = @transform_10, window_bounds = array<i64: 32, 32>}, {pipeline_mode = #tpu.pipeline_mode<synchronous>, transform_indices = @transform_11, window_bounds = array<i64: 1, 32>}, {pipeline_mode = #tpu.pipeline_mode<synchronous>, transform_indices = @transform_12, window_bounds = array<i64: 1, 32>}, {pipeline_mode = #tpu.pipeline_mode<synchronous>, transform_indices = @transform_13, window_bounds = array<i64: 1, 32>}, {pipeline_mode = #tpu.pipeline_mode<synchronous>, transform_indices = @transform_14, window_bounds = array<i64: 32, 128>}, {pipeline_mode = #tpu.pipeline_mode<synchronous>, transform_indices = @transform_15, window_bounds = array<i64: 1, 128>}, {pipeline_mode = #tpu.pipeline_mode<synchronous>, transform_indices = @transform_16, window_bounds = array<i64: 128, 32>}, {pipeline_mode = #tpu.pipeline_mode<synchronous>, transform_indices = @transform_17, window_bounds = array<i64: 1, 32>}, {transform_indices = @transform_18, window_bounds = array<i64: 1, 8, 32>}]} {
    %c0_i32 = arith.constant 0 : i32
    %0 = arith.cmpi eq, %arg1, %c0_i32 : i32
    %1 = arith.extui %0 : i1 to i32
    %c0_i32_0 = arith.constant 0 : i32
    %2 = arith.cmpi ne, %1, %c0_i32_0 : i32
    scf.if %2 {
      %c0_58 = arith.constant 0 : index
      %c0_59 = arith.constant 0 : index
      %c0_60 = arith.constant 0 : index
      %110 = vector.load %arg3[%c0_58, %c0_59, %c0_60] : memref<1x8x32xf32, #tpu.memory_space<vmem>>, vector<1x8x32xf32>
      %111 = vector.shape_cast %110 : vector<1x8x32xf32> to vector<8x32xf32>
      %cst_61 = arith.constant dense<0.000000e+00> : vector<8xf32>
      %112 = vector.multi_reduction <add>, %111, %cst_61 [1] : vector<8x32xf32> to vector<8xf32>
      %113 = vector.shape_cast %112 : vector<8xf32> to vector<8x1xf32>
      %cst_62 = arith.constant 3.200000e+01 : f32
      %114 = vector.broadcast %cst_62 : f32 to vector<8x1xf32>
      %115 = arith.divf %113, %114 : vector<8x1xf32>
      %116 = vector.broadcast %115 : vector<8x1xf32> to vector<8x32xf32>
      %117 = arith.subf %111, %116 : vector<8x32xf32>
      %118 = vector.broadcast %115 : vector<8x1xf32> to vector<8x32xf32>
      %119 = arith.subf %111, %118 : vector<8x32xf32>
      %120 = arith.mulf %117, %119 : vector<8x32xf32>
      %cst_63 = arith.constant dense<0.000000e+00> : vector<8xf32>
      %121 = vector.multi_reduction <add>, %120, %cst_63 [1] : vector<8x32xf32> to vector<8xf32>
      %122 = vector.shape_cast %121 : vector<8xf32> to vector<8x1xf32>
      %cst_64 = arith.constant 3.200000e+01 : f32
      %123 = vector.broadcast %cst_64 : f32 to vector<8x1xf32>
      %124 = arith.divf %122, %123 : vector<8x1xf32>
      %125 = vector.broadcast %115 : vector<8x1xf32> to vector<8x32xf32>
      %126 = arith.subf %111, %125 : vector<8x32xf32>
      %cst_65 = arith.constant 9.99999974E-6 : f32
      %127 = vector.broadcast %cst_65 : f32 to vector<8x1xf32>
      %128 = arith.addf %124, %127 : vector<8x1xf32>
      %129 = math.rsqrt %128 : vector<8x1xf32>
      %130 = vector.broadcast %129 : vector<8x1xf32> to vector<8x32xf32>
      %131 = arith.mulf %126, %130 : vector<8x32xf32>
      %c0_66 = arith.constant 0 : index
      %c0_67 = arith.constant 0 : index
      %132 = vector.load %arg4[%c0_66, %c0_67] : memref<1x32xf32, #tpu.memory_space<vmem>>, vector<1x32xf32>
      %133 = vector.broadcast %132 : vector<1x32xf32> to vector<8x32xf32>
      %134 = arith.mulf %131, %133 : vector<8x32xf32>
      %c0_68 = arith.constant 0 : index
      %c0_69 = arith.constant 0 : index
      %135 = vector.load %arg5[%c0_68, %c0_69] : memref<1x32xf32, #tpu.memory_space<vmem>>, vector<1x32xf32>
      %136 = vector.broadcast %135 : vector<1x32xf32> to vector<8x32xf32>
      %137 = arith.addf %134, %136 : vector<8x32xf32>
      %138 = arith.truncf %137 : vector<8x32xf32> to vector<8x32xbf16>
      %c0_70 = arith.constant 0 : index
      %c0_71 = arith.constant 0 : index
      %139 = vector.load %arg8[%c0_70, %c0_71] : memref<32x32xbf16, #tpu.memory_space<vmem>>, vector<32x32xbf16>
      %cst_72 = arith.constant dense<0.000000e+00> : vector<8x32xf32>
      %140 = tpu.matmul %138, %139, %cst_72 {dimension_numbers = #tpu.dot_dimension_numbers<[1], [0], [0], [1], [0, 0, 1, 1], [], []>} : vector<8x32xbf16>, vector<32x32xbf16>, vector<8x32xf32> -> vector<8x32xf32>
      %c0_73 = arith.constant 0 : index
      %c0_74 = arith.constant 0 : index
      %141 = vector.load %arg9[%c0_73, %c0_74] : memref<1x32xf32, #tpu.memory_space<vmem>>, vector<1x32xf32>
      %142 = vector.broadcast %141 : vector<1x32xf32> to vector<8x32xf32>
      %143 = arith.addf %140, %142 : vector<8x32xf32>
      %144 = arith.truncf %143 : vector<8x32xf32> to vector<8x32xbf16>
      %c0_75 = arith.constant 0 : index
      %c0_76 = arith.constant 0 : index
      %145 = vector.load %arg21[%c0_75, %c0_76] : memref<8x32xbf16, #tpu.memory_space<vmem>>, vector<8x32xbf16>
      tpu.vector_store %arg21[%c0_75, %c0_76], %144 {strides = array<i32>} : memref<8x32xbf16, #tpu.memory_space<vmem>>, vector<8x32xbf16>,
      %c0_77 = arith.constant 0 : index
      %c0_78 = arith.constant 0 : index
      %146 = vector.load %arg10[%c0_77, %c0_78] : memref<32x32xbf16, #tpu.memory_space<vmem>>, vector<32x32xbf16>
      %cst_79 = arith.constant dense<0.000000e+00> : vector<8x32xf32>
      %147 = tpu.matmul %138, %146, %cst_79 {dimension_numbers = #tpu.dot_dimension_numbers<[1], [0], [0], [1], [0, 0, 1, 1], [], []>} : vector<8x32xbf16>, vector<32x32xbf16>, vector<8x32xf32> -> vector<8x32xf32>
      %c0_80 = arith.constant 0 : index
      %c0_81 = arith.constant 0 : index
      %148 = vector.load %arg11[%c0_80, %c0_81] : memref<1x32xf32, #tpu.memory_space<vmem>>, vector<1x32xf32>
      %149 = vector.broadcast %148 : vector<1x32xf32> to vector<8x32xf32>
      %150 = arith.addf %147, %149 : vector<8x32xf32>
      %151 = arith.truncf %150 : vector<8x32xf32> to vector<8x32xbf16>
      %c0_82 = arith.constant 0 : index
      %c0_83 = arith.constant 0 : index
      %152 = vector.load %arg22[%c0_82, %c0_83] : memref<8x32xbf16, #tpu.memory_space<vmem>>, vector<8x32xbf16>
      tpu.vector_store %arg22[%c0_82, %c0_83], %151 {strides = array<i32>} : memref<8x32xbf16, #tpu.memory_space<vmem>>, vector<8x32xbf16>,
    } else {
    }
    %c0 = arith.constant 0 : index
    %c0_1 = arith.constant 0 : index
    %c0_2 = arith.constant 0 : index
    %3 = vector.load %arg2[%c0, %c0_1, %c0_2] : memref<1x8x32xf32, #tpu.memory_space<vmem>>, vector<1x8x32xf32>
    %4 = vector.shape_cast %3 : vector<1x8x32xf32> to vector<8x32xf32>
    %cst = arith.constant dense<0.000000e+00> : vector<8xf32>
    %5 = vector.multi_reduction <add>, %4, %cst [1] : vector<8x32xf32> to vector<8xf32>
    %6 = vector.shape_cast %5 : vector<8xf32> to vector<8x1xf32>
    %cst_3 = arith.constant 3.200000e+01 : f32
    %7 = vector.broadcast %cst_3 : f32 to vector<8x1xf32>
    %8 = arith.divf %6, %7 : vector<8x1xf32>
    %9 = vector.broadcast %8 : vector<8x1xf32> to vector<8x32xf32>
    %10 = arith.subf %4, %9 : vector<8x32xf32>
    %11 = vector.broadcast %8 : vector<8x1xf32> to vector<8x32xf32>
    %12 = arith.subf %4, %11 : vector<8x32xf32>
    %13 = arith.mulf %10, %12 : vector<8x32xf32>
    %cst_4 = arith.constant dense<0.000000e+00> : vector<8xf32>
    %14 = vector.multi_reduction <add>, %13, %cst_4 [1] : vector<8x32xf32> to vector<8xf32>
    %15 = vector.shape_cast %14 : vector<8xf32> to vector<8x1xf32>
    %cst_5 = arith.constant 3.200000e+01 : f32
    %16 = vector.broadcast %cst_5 : f32 to vector<8x1xf32>
    %17 = arith.divf %15, %16 : vector<8x1xf32>
    %18 = vector.broadcast %8 : vector<8x1xf32> to vector<8x32xf32>
    %19 = arith.subf %4, %18 : vector<8x32xf32>
    %cst_6 = arith.constant 9.99999974E-6 : f32
    %20 = vector.broadcast %cst_6 : f32 to vector<8x1xf32>
    %21 = arith.addf %17, %20 : vector<8x1xf32>
    %22 = math.rsqrt %21 : vector<8x1xf32>
    %23 = vector.broadcast %22 : vector<8x1xf32> to vector<8x32xf32>
    %24 = arith.mulf %19, %23 : vector<8x32xf32>
    %c0_7 = arith.constant 0 : index
    %c0_8 = arith.constant 0 : index
    %25 = vector.load %arg4[%c0_7, %c0_8] : memref<1x32xf32, #tpu.memory_space<vmem>>, vector<1x32xf32>
    %26 = vector.broadcast %25 : vector<1x32xf32> to vector<8x32xf32>
    %27 = arith.mulf %24, %26 : vector<8x32xf32>
    %c0_9 = arith.constant 0 : index
    %c0_10 = arith.constant 0 : index
    %28 = vector.load %arg5[%c0_9, %c0_10] : memref<1x32xf32, #tpu.memory_space<vmem>>, vector<1x32xf32>
    %29 = vector.broadcast %28 : vector<1x32xf32> to vector<8x32xf32>
    %30 = arith.addf %27, %29 : vector<8x32xf32>
    %31 = arith.truncf %30 : vector<8x32xf32> to vector<8x32xbf16>
    %c0_11 = arith.constant 0 : index
    %c0_12 = arith.constant 0 : index
    %32 = vector.load %arg6[%c0_11, %c0_12] : memref<32x32xbf16, #tpu.memory_space<vmem>>, vector<32x32xbf16>
    %cst_13 = arith.constant dense<0.000000e+00> : vector<8x32xf32>
    %33 = tpu.matmul %31, %32, %cst_13 {dimension_numbers = #tpu.dot_dimension_numbers<[1], [0], [0], [1], [0, 0, 1, 1], [], []>} : vector<8x32xbf16>, vector<32x32xbf16>, vector<8x32xf32> -> vector<8x32xf32>
    %c0_14 = arith.constant 0 : index
    %c0_15 = arith.constant 0 : index
    %34 = vector.load %arg7[%c0_14, %c0_15] : memref<1x32xf32, #tpu.memory_space<vmem>>, vector<1x32xf32>
    %35 = vector.broadcast %34 : vector<1x32xf32> to vector<8x32xf32>
    %36 = arith.addf %33, %35 : vector<8x32xf32>
    %37 = arith.truncf %36 : vector<8x32xf32> to vector<8x32xbf16>
    %c0_16 = arith.constant 0 : index
    %c0_17 = arith.constant 0 : index
    %38 = vector.load %arg21[%c0_16, %c0_17] : memref<8x32xbf16, #tpu.memory_space<vmem>>, vector<8x32xbf16>
    "tpu.trace_start"() <{level = 10 : i32, message = "qd,kd->qk"}> : () -> ()
    %cst_18 = arith.constant dense<0.000000e+00> : vector<8x8xf32>
    %39 = tpu.matmul %37, %38, %cst_18 {dimension_numbers = #tpu.dot_dimension_numbers<[1], [1], [0], [0], [0, 0, 1, 0], [], []>} : vector<8x32xbf16>, vector<8x32xbf16>, vector<8x8xf32> -> vector<8x8xf32>
    "tpu.trace_stop"() : () -> ()
    %cst_19 = arith.constant 0.176776692 : f32
    %40 = vector.broadcast %cst_19 : f32 to vector<8x8xf32>
    %41 = arith.mulf %39, %40 : vector<8x8xf32>
    %cst_20 = arith.constant dense<0xFF800000> : vector<8xf32>
    %42 = vector.multi_reduction <maximumf>, %41, %cst_20 [1] : vector<8x8xf32> to vector<8xf32>
    %43 = vector.shape_cast %42 : vector<8xf32> to vector<8x1xf32>
    %44 = vector.broadcast %43 : vector<8x1xf32> to vector<8x8xf32>
    %45 = arith.subf %41, %44 : vector<8x8xf32>
    %46 = math.exp %45 : vector<8x8xf32>
    %cst_21 = arith.constant dense<0.000000e+00> : vector<8xf32>
    %47 = vector.multi_reduction <add>, %46, %cst_21 [1] : vector<8x8xf32> to vector<8xf32>
    %48 = vector.shape_cast %47 : vector<8xf32> to vector<8x1xf32>
    %49 = tpu.reciprocal %48 {approx = true} : vector<8x1xf32> -> vector<8x1xf32>
    %50 = vector.broadcast %49 : vector<8x1xf32> to vector<8x8xf32>
    %51 = arith.mulf %46, %50 : vector<8x8xf32>
    %52 = arith.truncf %51 : vector<8x8xf32> to vector<8x8xbf16>
    %c0_22 = arith.constant 0 : index
    %c0_23 = arith.constant 0 : index
    %53 = vector.load %arg22[%c0_22, %c0_23] : memref<8x32xbf16, #tpu.memory_space<vmem>>, vector<8x32xbf16>
    %cst_24 = arith.constant dense<0.000000e+00> : vector<8x32xf32>
    %54 = tpu.matmul %52, %53, %cst_24 {dimension_numbers = #tpu.dot_dimension_numbers<[1], [0], [0], [1], [0, 0, 1, 1], [], []>} : vector<8x8xbf16>, vector<8x32xbf16>, vector<8x32xf32> -> vector<8x32xf32>
    %55 = arith.truncf %54 : vector<8x32xf32> to vector<8x32xbf16>
    %c0_25 = arith.constant 0 : index
    %c0_26 = arith.constant 0 : index
    %56 = vector.load %arg23[%c0_25, %c0_26] : memref<8x32xbf16, #tpu.memory_space<vmem>>, vector<8x32xbf16>
    tpu.vector_store %arg23[%c0_25, %c0_26], %55 {strides = array<i32>} : memref<8x32xbf16, #tpu.memory_space<vmem>>, vector<8x32xbf16>,
    %c0_27 = arith.constant 0 : index
    %c0_28 = arith.constant 0 : index
    %57 = vector.load %arg23[%c0_27, %c0_28] : memref<8x32xbf16, #tpu.memory_space<vmem>>, vector<8x32xbf16>
    %c0_29 = arith.constant 0 : index
    %c0_30 = arith.constant 0 : index
    %58 = vector.load %arg12[%c0_29, %c0_30] : memref<32x32xbf16, #tpu.memory_space<vmem>>, vector<32x32xbf16>
    %cst_31 = arith.constant dense<0.000000e+00> : vector<8x32xf32>
    %59 = tpu.matmul %57, %58, %cst_31 {dimension_numbers = #tpu.dot_dimension_numbers<[1], [0], [0], [1], [0, 0, 1, 1], [], []>} : vector<8x32xbf16>, vector<32x32xbf16>, vector<8x32xf32> -> vector<8x32xf32>
    %c0_32 = arith.constant 0 : index
    %c0_33 = arith.constant 0 : index
    %60 = vector.load %arg13[%c0_32, %c0_33] : memref<1x32xf32, #tpu.memory_space<vmem>>, vector<1x32xf32>
    %61 = vector.broadcast %60 : vector<1x32xf32> to vector<8x32xf32>
    %62 = arith.addf %59, %61 : vector<8x32xf32>
    %63 = arith.addf %4, %62 : vector<8x32xf32>
    %cst_34 = arith.constant dense<0.000000e+00> : vector<8xf32>
    %64 = vector.multi_reduction <add>, %63, %cst_34 [1] : vector<8x32xf32> to vector<8xf32>
    %65 = vector.shape_cast %64 : vector<8xf32> to vector<8x1xf32>
    %cst_35 = arith.constant 3.200000e+01 : f32
    %66 = vector.broadcast %cst_35 : f32 to vector<8x1xf32>
    %67 = arith.divf %65, %66 : vector<8x1xf32>
    %68 = vector.broadcast %67 : vector<8x1xf32> to vector<8x32xf32>
    %69 = arith.subf %63, %68 : vector<8x32xf32>
    %70 = vector.broadcast %67 : vector<8x1xf32> to vector<8x32xf32>
    %71 = arith.subf %63, %70 : vector<8x32xf32>
    %72 = arith.mulf %69, %71 : vector<8x32xf32>
    %cst_36 = arith.constant dense<0.000000e+00> : vector<8xf32>
    %73 = vector.multi_reduction <add>, %72, %cst_36 [1] : vector<8x32xf32> to vector<8xf32>
    %74 = vector.shape_cast %73 : vector<8xf32> to vector<8x1xf32>
    %cst_37 = arith.constant 3.200000e+01 : f32
    %75 = vector.broadcast %cst_37 : f32 to vector<8x1xf32>
    %76 = arith.divf %74, %75 : vector<8x1xf32>
    %77 = vector.broadcast %67 : vector<8x1xf32> to vector<8x32xf32>
    %78 = arith.subf %63, %77 : vector<8x32xf32>
    %cst_38 = arith.constant 9.99999974E-6 : f32
    %79 = vector.broadcast %cst_38 : f32 to vector<8x1xf32>
    %80 = arith.addf %76, %79 : vector<8x1xf32>
    %81 = math.rsqrt %80 : vector<8x1xf32>
    %82 = vector.broadcast %81 : vector<8x1xf32> to vector<8x32xf32>
    %83 = arith.mulf %78, %82 : vector<8x32xf32>
    %c0_39 = arith.constant 0 : index
    %c0_40 = arith.constant 0 : index
    %84 = vector.load %arg14[%c0_39, %c0_40] : memref<1x32xf32, #tpu.memory_space<vmem>>, vector<1x32xf32>
    %85 = vector.broadcast %84 : vector<1x32xf32> to vector<8x32xf32>
    %86 = arith.mulf %83, %85 : vector<8x32xf32>
    %c0_41 = arith.constant 0 : index
    %c0_42 = arith.constant 0 : index
    %87 = vector.load %arg15[%c0_41, %c0_42] : memref<1x32xf32, #tpu.memory_space<vmem>>, vector<1x32xf32>
    %88 = vector.broadcast %87 : vector<1x32xf32> to vector<8x32xf32>
    %89 = arith.addf %86, %88 : vector<8x32xf32>
    %90 = arith.truncf %89 : vector<8x32xf32> to vector<8x32xbf16>
    %cst_43 = arith.constant 0.000000e+00 : f32
    %91 = vector.broadcast %cst_43 : f32 to vector<8x32xf32>
    %c0_44 = arith.constant 0 : index
    %c0_45 = arith.constant 0 : index
    %92 = vector.load %arg16[%c0_44, %c0_45] : memref<32x128xbf16, #tpu.memory_space<vmem>>, vector<32x128xbf16>
    %cst_46 = arith.constant dense<0.000000e+00> : vector<8x128xf32>
    %93 = tpu.matmul %90, %92, %cst_46 {dimension_numbers = #tpu.dot_dimension_numbers<[1], [0], [0], [1], [0, 0, 1, 1], [], []>} : vector<8x32xbf16>, vector<32x128xbf16>, vector<8x128xf32> -> vector<8x128xf32>
    %c0_47 = arith.constant 0 : index
    %c0_48 = arith.constant 0 : index
    %94 = vector.load %arg17[%c0_47, %c0_48] : memref<1x128xf32, #tpu.memory_space<vmem>>, vector<1x128xf32>
    %95 = vector.broadcast %94 : vector<1x128xf32> to vector<8x128xf32>
    %96 = arith.addf %93, %95 : vector<8x128xf32>
    %cst_49 = arith.constant 0.000000e+00 : f32
    %97 = vector.broadcast %cst_49 : f32 to vector<8x128xf32>
    %98 = arith.maximumf %96, %97 : vector<8x128xf32>
    %99 = arith.truncf %98 : vector<8x128xf32> to vector<8x128xbf16>
    %c0_50 = arith.constant 0 : index
    %c0_51 = arith.constant 0 : index
    %100 = vector.load %arg18[%c0_50, %c0_51] : memref<128x32xbf16, #tpu.memory_space<vmem>>, vector<128x32xbf16>
    %cst_52 = arith.constant dense<0.000000e+00> : vector<8x32xf32>
    %101 = tpu.matmul %99, %100, %cst_52 {dimension_numbers = #tpu.dot_dimension_numbers<[1], [0], [0], [1], [0, 0, 1, 1], [], []>} : vector<8x128xbf16>, vector<128x32xbf16>, vector<8x32xf32> -> vector<8x32xf32>
    %102 = arith.addf %91, %101 : vector<8x32xf32>
    %c0_53 = arith.constant 0 : index
    %c0_54 = arith.constant 0 : index
    %103 = vector.load %arg19[%c0_53, %c0_54] : memref<1x32xf32, #tpu.memory_space<vmem>>, vector<1x32xf32>
    %104 = vector.broadcast %103 : vector<1x32xf32> to vector<8x32xf32>
    %105 = arith.addf %102, %104 : vector<8x32xf32>
    %106 = arith.addf %63, %105 : vector<8x32xf32>
    %c0_55 = arith.constant 0 : index
    %c0_56 = arith.constant 0 : index
    %c0_57 = arith.constant 0 : index
    %107 = vector.load %arg20[%c0_55, %c0_56, %c0_57] : memref<1x8x32xf32, #tpu.memory_space<vmem>>, vector<1x8x32xf32>
    %108 = vector.shape_cast %107 : vector<1x8x32xf32> to vector<8x32xf32>
    %109 = vector.shape_cast %106 : vector<8x32xf32> to vector<1x8x32xf32>
    tpu.vector_store %arg20[%c0_55, %c0_56, %c0_57], %109 {strides = array<i32>} : memref<1x8x32xf32, #tpu.memory_space<vmem>>, vector<1x8x32xf32>,
    return
  }
  func.func @transform_0(%arg0: i32, %arg1: i32) -> (i32, i32, i32) {
    %c0_i32 = arith.constant 0 : i32
    %c0_i32_0 = arith.constant 0 : i32
    return %arg0, %arg1, %c0_i32 : i32, i32, i32
  }
  func.func @transform_1(%arg0: i32, %arg1: i32) -> (i32, i32, i32) {
    %c0_i32 = arith.constant 0 : i32
    %c0_i32_0 = arith.constant 0 : i32
    %c0_i32_1 = arith.constant 0 : i32
    return %arg0, %c0_i32, %c0_i32_0 : i32, i32, i32
  }
  func.func @transform_2(%arg0: i32, %arg1: i32) -> (i32, i32) {
    %c0_i32 = arith.constant 0 : i32
    %c0_i32_0 = arith.constant 0 : i32
    %c0_i32_1 = arith.constant 0 : i32
    return %c0_i32, %c0_i32_0 : i32, i32
  }
  func.func @transform_3(%arg0: i32, %arg1: i32) -> (i32, i32) {
    %c0_i32 = arith.constant 0 : i32
    %c0_i32_0 = arith.constant 0 : i32
    %c0_i32_1 = arith.constant 0 : i32
    return %c0_i32, %c0_i32_0 : i32, i32
  }
  func.func @transform_4(%arg0: i32, %arg1: i32) -> (i32, i32) {
    %c0_i32 = arith.constant 0 : i32
    %c0_i32_0 = arith.constant 0 : i32
    %c0_i32_1 = arith.constant 0 : i32
    return %c0_i32, %c0_i32_0 : i32, i32
  }
  func.func @transform_5(%arg0: i32, %arg1: i32) -> (i32, i32) {
    %c0_i32 = arith.constant 0 : i32
    %c0_i32_0 = arith.constant 0 : i32
    %c0_i32_1 = arith.constant 0 : i32
    return %c0_i32, %c0_i32_0 : i32, i32
  }
  func.func @transform_6(%arg0: i32, %arg1: i32) -> (i32, i32) {
    %c0_i32 = arith.constant 0 : i32
    %c0_i32_0 = arith.constant 0 : i32
    %c0_i32_1 = arith.constant 0 : i32
    return %c0_i32, %c0_i32_0 : i32, i32
  }
  func.func @transform_7(%arg0: i32, %arg1: i32) -> (i32, i32) {
    %c0_i32 = arith.constant 0 : i32
    %c0_i32_0 = arith.constant 0 : i32
    %c0_i32_1 = arith.constant 0 : i32
    return %c0_i32, %c0_i32_0 : i32, i32
  }
  func.func @transform_8(%arg0: i32, %arg1: i32) -> (i32, i32) {
    %c0_i32 = arith.constant 0 : i32
    %c0_i32_0 = arith.constant 0 : i32
    %c0_i32_1 = arith.constant 0 : i32
    return %c0_i32, %c0_i32_0 : i32, i32
  }
  func.func @transform_9(%arg0: i32, %arg1: i32) -> (i32, i32) {
    %c0_i32 = arith.constant 0 : i32
    %c0_i32_0 = arith.constant 0 : i32
    %c0_i32_1 = arith.constant 0 : i32
    return %c0_i32, %c0_i32_0 : i32, i32
  }
  func.func @transform_10(%arg0: i32, %arg1: i32) -> (i32, i32) {
    %c0_i32 = arith.constant 0 : i32
    %c0_i32_0 = arith.constant 0 : i32
    %c0_i32_1 = arith.constant 0 : i32
    return %c0_i32, %c0_i32_0 : i32, i32
  }
  func.func @transform_11(%arg0: i32, %arg1: i32) -> (i32, i32) {
    %c0_i32 = arith.constant 0 : i32
    %c0_i32_0 = arith.constant 0 : i32
    %c0_i32_1 = arith.constant 0 : i32
    return %c0_i32, %c0_i32_0 : i32, i32
  }
  func.func @transform_12(%arg0: i32, %arg1: i32) -> (i32, i32) {
    %c0_i32 = arith.constant 0 : i32
    %c0_i32_0 = arith.constant 0 : i32
    %c0_i32_1 = arith.constant 0 : i32
    return %c0_i32, %c0_i32_0 : i32, i32
  }
  func.func @transform_13(%arg0: i32, %arg1: i32) -> (i32, i32) {
    %c0_i32 = arith.constant 0 : i32
    %c0_i32_0 = arith.constant 0 : i32
    %c0_i32_1 = arith.constant 0 : i32
    return %c0_i32, %c0_i32_0 : i32, i32
  }
  func.func @transform_14(%arg0: i32, %arg1: i32) -> (i32, i32) {
    %c0_i32 = arith.constant 0 : i32
    %c0_i32_0 = arith.constant 0 : i32
    %c0_i32_1 = arith.constant 0 : i32
    return %c0_i32, %c0_i32_0 : i32, i32
  }
  func.func @transform_15(%arg0: i32, %arg1: i32) -> (i32, i32) {
    %c0_i32 = arith.constant 0 : i32
    %c0_i32_0 = arith.constant 0 : i32
    %c0_i32_1 = arith.constant 0 : i32
    return %c0_i32, %c0_i32_0 : i32, i32
  }
  func.func @transform_16(%arg0: i32, %arg1: i32) -> (i32, i32) {
    %c0_i32 = arith.constant 0 : i32
    %c0_i32_0 = arith.constant 0 : i32
    %c0_i32_1 = arith.constant 0 : i32
    return %c0_i32, %c0_i32_0 : i32, i32
  }
  func.func @transform_17(%arg0: i32, %arg1: i32) -> (i32, i32) {
    %c0_i32 = arith.constant 0 : i32
    %c0_i32_0 = arith.constant 0 : i32
    %c0_i32_1 = arith.constant 0 : i32
    return %c0_i32, %c0_i32_0 : i32, i32
  }
  func.func @transform_18(%arg0: i32, %arg1: i32) -> (i32, i32, i32) {
    %c0_i32 = arith.constant 0 : i32
    %c0_i32_0 = arith.constant 0 : i32
    return %arg0, %arg1, %c0_i32 : i32, i32, i32
  }
}

</mosaic_0001>

<llo_original>
// kernel: tpu_custom_call.1
$region0: #{tpu_custom_call.1}
  #allocation0 [shape = 'u32[]', space=smem, size = 0x4, offset = 0x4, fixed_abs, tag = 'smem constant byte address 0x4 - core index']
  #allocation1 [shape = 'u32[144,128]{1,0:T(1,128)}', space=vmem, size = 0x12000, scoped, tag = 'internal scratch']
  %s0 = inlined_call_operand.hbm [shape: f32[8,128], index: 0, kind: input, shape index: {}]
  %s1 = inlined_call_operand.hbm [shape: f32[16,128], index: 1, kind: input, shape index: {}]
  %s2 = inlined_call_operand.hbm [shape: f32[16,128], index: 2, kind: output, shape index: {}]
  %s3 = sld [smem:[#allocation0]]
  $region49: #{tpu_custom_call.1} parent=0
    _
  %s5 = ssub.s32 1, %s3
  %s6 = scalar_select 0, %s5, %s3
  $region1: #{tpu_custom_call.1} parent=0
    #allocation2 [shape = 'u8[4096]{0}', space=vmem, size = 0x1000, scoped, tag = 'input window, operand 0, single buffered']
    #allocation3 [shape = 's32[2]{0}', space=sflag, size = 0x8, scoped, tag = 'scoped memory for tpu_custom_call.1']
    #allocation4 [shape = 's32[2]{0}', space=sflag, size = 0x8, scoped, tag = 'scoped memory for tpu_custom_call.1']
    #allocation5 [shape = 'u8[4096]{0}', space=vmem, size = 0x1000, scoped, tag = 'input window, operand 1, single buffered']
    #allocation6 [shape = 's32[1]{0}', space=sflag, size = 0x4, scoped, tag = 'scoped memory for tpu_custom_call.1']
    #allocation7 [shape = 'u8[8192]{0}', space=vmem, size = 0x2000, scoped, tag = 'output window, operand 0']
    %7 = vsyncpa [#allocation3], 0
    %8 = vsyncpa [#allocation6], 0
    %9 = vsyncpa [#allocation4], 0
    %s10 = scalar_lea.sflag [#allocation4], 1
    %11 = vsyncpa %s10, 0
    loop: start=0, step=1, limit=4
    $region2: #{tpu_custom_call.1} parent=1 // loop_pre_header
      _
    $region3: #{tpu_custom_call.1} parent=1 // loop_header
      %s13 = sphi 0, %s17
      %p14 = scmp.ge.s32.totalorder %s13, 4
      %s21 = sphi 0, %s21
      %s23 = sphi 0, %s21
      %s24 = sphi 0, %s23
      %s38 = sphi 0, %s24
      %s44 = sphi 0, %s46
      %s47 = sphi 0, %s44
      %s48 = sphi 0, %s47
      %s64 = sphi 0, %s48
      %s70 = sphi 0, %s72
      %s73 = sphi 0, %s70
      %s74 = sphi 0, %s73
      %s90 = sphi 0, %s74
    $region4: #{tpu_custom_call.1} parent=1 // loop_header_branch
      %16 = sbr.rel (%p14) target = $region8
    $region5: #{tpu_custom_call.1} parent=1 // loop_body
      %s18 = ssub.s32 %s13, 1
      %s19 = ssub.s32 %s13, 2
      %s20 = sadd.s32 %s13, 1
      %s22 = sadd.s32 %s21, 1
      %p25 = scmp.eq.s32.totalorder %s13, 1
      %p26 = scmp.ne.s32.totalorder %s21, %s23
      %p27 = scmp.eq.s32.totalorder %s13, 0
      %p28 = por %p26, %p27
      %p29 = scmp.ne.s32.totalorder %s21, %s23
      %p30 = scmp.eq.s32.totalorder %s18, 1
      %p31 = por %p29, %p30
      %p32 = scmp.ne.s32.totalorder %s23, %s24
      %p33 = scmp.eq.s32.totalorder %s18, 0
      %p34 = por %p32, %p33
      %p35 = scmp.ne.s32.totalorder %s23, %s24
      %p36 = scmp.eq.s32.totalorder %s19, 1
      %p37 = por %p35, %p36
      %p39 = scmp.ne.s32.totalorder %s24, %s38
      %p40 = scmp.eq.s32.totalorder %s19, 0
      %p41 = por %p39, %p40
      %s42 = ssub.s32 %s13, %s20
      %p43 = scmp.eq.s32.totalorder %s42, 0
      %s45 = sadd.s32 %s44, 1
      %s46 = scalar_select %p43, %s44, %s45
      %p49 = pneg %p43
      %p50 = scmp.eq.s32.totalorder %s13, 1
      %p51 = por %p49, %p50
      %p52 = scmp.ne.s32.totalorder %s44, %s47
      %p53 = scmp.eq.s32.totalorder %s13, 0
      %p54 = por %p52, %p53
      %p55 = scmp.ne.s32.totalorder %s44, %s47
      %p56 = scmp.eq.s32.totalorder %s18, 1
      %p57 = por %p55, %p56
      %p58 = scmp.ne.s32.totalorder %s47, %s48
      %p59 = scmp.eq.s32.totalorder %s18, 0
      %p60 = por %p58, %p59
      %p61 = scmp.ne.s32.totalorder %s47, %s48
      %p62 = scmp.eq.s32.totalorder %s19, 1
      %p63 = por %p61, %p62
      %p65 = scmp.ne.s32.totalorder %s48, %s64
      %p66 = scmp.eq.s32.totalorder %s19, 0
      %p67 = por %p65, %p66
      %s68 = ssub.s32 %s13, %s20
      %p69 = scmp.eq.s32.totalorder %s68, 0
      %s71 = sadd.s32 %s70, 1
      %s72 = scalar_select %p69, %s70, %s71
      %p75 = pneg %p69
      %p76 = scmp.eq.s32.totalorder %s13, 1
      %p77 = por %p75, %p76
      %p78 = scmp.ne.s32.totalorder %s70, %s73
      %p79 = scmp.eq.s32.totalorder %s13, 0
      %p80 = por %p78, %p79
      %p81 = scmp.ne.s32.totalorder %s70, %s73
      %p82 = scmp.eq.s32.totalorder %s18, 1
      %p83 = por %p81, %p82
      %p84 = scmp.ne.s32.totalorder %s73, %s74
      %p85 = scmp.eq.s32.totalorder %s18, 0
      %p86 = por %p84, %p85
      %p87 = scmp.ne.s32.totalorder %s73, %s74
      %p88 = scmp.eq.s32.totalorder %s19, 1
      %p89 = por %p87, %p88
      %p91 = scmp.ne.s32.totalorder %s74, %s90
      %p92 = scmp.eq.s32.totalorder %s19, 0
      %p93 = por %p91, %p92
      %p94 = scmp.le.s32.totalorder 1, %s13
      %p95 = scmp.lt.s32.totalorder %s13, 3
      %p96 = pnand %p94, %p95
      %p97 = pneg %p96
      // Predicated region
      $region9: #{tpu_custom_call.1} parent=5 // pred_check
        _
      $region10: #{tpu_custom_call.1} parent=5 // pred_check_branch
        %99 = sbr.rel (%p96) target = $region12
      $region11: #{tpu_custom_call.1} parent=5 // pred_region
        %s100 = ssub.s32 %s13, 1
        // Predicated region
        $region13: #{tpu_custom_call.1} parent=11 // pred_check
          %p101 = pneg %p34
        $region14: #{tpu_custom_call.1} parent=11 // pred_check_branch
          %103 = sbr.rel (%p101) target = $region16
        $region15: #{tpu_custom_call.1} parent=11 // pred_region
          %s105 = ssub.s32 128, 128
          %106 = vsyncadd [#allocation3], %s105
          %s108 = sshll.u32 [#allocation2], 4
          %s109 = int_to_ptr.vmem [resolvable:$true] %s108
          %111 = dma.hbm_to_vmem [thread:$0]  %s0, 128, %s109, [#allocation3]
        $region16: #{tpu_custom_call.1} parent=11 // pred_fallthru
          _
        // Predicated region
        $region17: #{tpu_custom_call.1} parent=11 // pred_check
          %p112 = pneg %p60
        $region18: #{tpu_custom_call.1} parent=11 // pred_check_branch
          %114 = sbr.rel (%p112) target = $region20
        $region19: #{tpu_custom_call.1} parent=11 // pred_region
          %s116 = ssub.s32 128, 128
          %117 = vsyncadd [#allocation6], %s116
          %s118 = smul.addr %s18, 128
          %s119 = scalar_lea.hbm %s1, %s118
          %s121 = sshll.u32 [#allocation5], 4
          %s122 = int_to_ptr.vmem [resolvable:$true] %s121
          %124 = dma.hbm_to_vmem [thread:$0]  %s119, 128, %s122, [#allocation6]
        $region20: #{tpu_custom_call.1} parent=11 // pred_fallthru
          _
      $region12: #{tpu_custom_call.1} parent=5 // pred_fallthru
        _
      %p125 = scmp.lt.s32.totalorder %s13, 2
      // Predicated region
      $region21: #{tpu_custom_call.1} parent=5 // pred_check
        %p126 = pneg %p125
      $region22: #{tpu_custom_call.1} parent=5 // pred_check_branch
        %128 = sbr.rel (%p126) target = $region24
      $region23: #{tpu_custom_call.1} parent=5 // pred_region
        _
      $region24: #{tpu_custom_call.1} parent=5 // pred_fallthru
        _
      %p129 = scmp.le.s32.totalorder 1, %s13
      %p130 = scmp.lt.s32.totalorder %s13, 3
      %p131 = pnand %p129, %p130
      %p132 = pneg %p131
      // Predicated region
      $region25: #{tpu_custom_call.1} parent=5 // pred_check
        _
      $region26: #{tpu_custom_call.1} parent=5 // pred_check_branch
        %134 = sbr.rel (%p131) target = $region28
      $region27: #{tpu_custom_call.1} parent=5 // pred_region
        %s135 = ssub.s32 %s13, 1
        // Predicated region
        $region29: #{tpu_custom_call.1} parent=27 // pred_check
          %p136 = pneg %p34
        $region30: #{tpu_custom_call.1} parent=27 // pred_check_branch
          %138 = sbr.rel (%p136) target = $region32
        $region31: #{tpu_custom_call.1} parent=27 // pred_region
          %139 = dma.done [#allocation3], 128
        $region32: #{tpu_custom_call.1} parent=27 // pred_fallthru
          _
        // Predicated region
        $region33: #{tpu_custom_call.1} parent=27 // pred_check
          %p140 = pneg %p60
        $region34: #{tpu_custom_call.1} parent=27 // pred_check_branch
          %142 = sbr.rel (%p140) target = $region36
        $region35: #{tpu_custom_call.1} parent=27 // pred_region
          %143 = dma.done [#allocation6], 128
        $region36: #{tpu_custom_call.1} parent=27 // pred_fallthru
          _
        %p144 = pneg %p34
        %p145 = pneg %p31
        %p146 = pneg %p60
        %p147 = pneg %p57
        %p148 = pneg %p86
        %p149 = pneg %p83
        %s150 = sand.u32 %s73, 1
        %s151 = scalar_lea.sflag [#allocation4], %s150
        %s152 = sand.u32 %s73, 1
        %s153 = smul.addr %s152, 8
        %s154 = scalar_lea.vmem [#allocation7], %s153
        %v155 = vld [vmem:[#allocation2] sm:$0xff]
        %v156 = vld [vmem:[#allocation5] sm:$0xff]
        %v157 = vadd.f32 %v155, %v156
        %158 = vst [vmem:[%s154] sm:$0xff] %v157
        %s159 = sand.u32 %s73, 1
        %s160 = scalar_lea.sflag [#allocation4], %s159
        %s161 = sand.u32 %s73, 1
        %s162 = smul.addr %s161, 8
        %s163 = scalar_lea.vmem [#allocation7], %s162
        // Predicated region
        $region37: #{tpu_custom_call.1} parent=27 // pred_check
          %p164 = pneg %p83
        $region38: #{tpu_custom_call.1} parent=27 // pred_check_branch
          %166 = sbr.rel (%p164) target = $region40
        $region39: #{tpu_custom_call.1} parent=27 // pred_region
          %s168 = ssub.s32 128, 128
          %169 = vsyncadd %s160, %s168
          %s170 = smul.addr %s18, 128
          %s171 = scalar_lea.hbm %s2, %s170
          %s173 = sshll.u32 %s163, 4
          %s174 = int_to_ptr.vmem [resolvable:$true] %s173
          %176 = dma.vmem_to_hbm [thread:$0]  %s174, 128, %s171, %s160
        $region40: #{tpu_custom_call.1} parent=27 // pred_fallthru
          _
      $region28: #{tpu_custom_call.1} parent=5 // pred_fallthru
        _
      %p177 = scmp.le.s32.totalorder 2, %s13
      // Predicated region
      $region41: #{tpu_custom_call.1} parent=5 // pred_check
        %p178 = pneg %p177
      $region42: #{tpu_custom_call.1} parent=5 // pred_check_branch
        %180 = sbr.rel (%p178) target = $region44
      $region43: #{tpu_custom_call.1} parent=5 // pred_region
        %s181 = ssub.s32 %s13, 2
        // Predicated region
        $region45: #{tpu_custom_call.1} parent=43 // pred_check
          %p182 = pneg %p89
        $region46: #{tpu_custom_call.1} parent=43 // pred_check_branch
          %184 = sbr.rel (%p182) target = $region48
        $region47: #{tpu_custom_call.1} parent=43 // pred_region
          %s185 = sand.u32 %s74, 1
          %s186 = scalar_lea.sflag [#allocation4], %s185
          %s187 = sand.u32 %s74, 1
          %s188 = smul.addr %s187, 8
          %s189 = scalar_lea.vmem [#allocation7], %s188
          %190 = dma.done %s186, 128
        $region48: #{tpu_custom_call.1} parent=43 // pred_fallthru
          _
      $region44: #{tpu_custom_call.1} parent=5 // pred_fallthru
        _
    $region6: #{tpu_custom_call.1} parent=1 // loop_footer
      %s17 = sadd.s32 1, %s13
    $region7: #{tpu_custom_call.1} parent=1 // loop_footer_branch
      %12 = sbr.rel target = $region3
    $region8: #{tpu_custom_call.1} parent=1 // loop_exit
      _
    %191 = vsyncpa [#allocation3], 1
    %s192 = scalar_lea.sflag [#allocation3], 1
    %193 = vsyncpa %s192, 1
    %194 = vsyncpa [#allocation6], 1
    %195 = vsyncpa [#allocation4], 1
    %s196 = scalar_lea.sflag [#allocation4], 1
    %197 = vsyncpa %s196, 1

// kernel: tpu_custom_call.1
$region0: #{tpu_custom_call.1}
  #allocation0 [shape = 'u32[]', space=smem, size = 0x4, offset = 0x4, fixed_abs, tag = 'smem constant byte address 0x4 - core index']
  #allocation1 [shape = 'u32[144,128]{1,0:T(1,128)}', space=vmem, size = 0x12000, scoped, tag = 'internal scratch']
  #allocation2 [shape = 'bf16[8,32]{1,0:T(8,128)(2,1)}', space=vmem, size = 0x800, scoped, tag = 'scratch operand']
  #allocation3 [shape = 'bf16[8,32]{1,0:T(8,128)(2,1)}', space=vmem, size = 0x800, scoped, tag = 'scratch operand']
  #allocation4 [shape = 'bf16[8,32]{1,0:T(8,128)(2,1)}', space=vmem, size = 0x800, scoped, tag = 'scratch operand']
  %s0 = inlined_call_operand.vmem [shape: f32[2,8,32], index: 0, kind: input, shape index: {}]
  %s1 = inlined_call_operand.vmem [shape: f32[2,8,32], index: 1, kind: input, shape index: {}]
  %s2 = inlined_call_operand.vmem [shape: f32[1,32], index: 2, kind: input, shape index: {}]
  %s3 = inlined_call_operand.hbm [shape: f32[1,32], index: 3, kind: input, shape index: {}]
  %s4 = inlined_call_operand.vmem [shape: bf16[32,32], index: 4, kind: input, shape index: {}]
  %s5 = inlined_call_operand.hbm [shape: f32[1,32], index: 5, kind: input, shape index: {}]
  %s6 = inlined_call_operand.vmem [shape: bf16[32,32], index: 6, kind: input, shape index: {}]
  %s7 = inlined_call_operand.hbm [shape: f32[1,32], index: 7, kind: input, shape index: {}]
  %s8 = inlined_call_operand.vmem [shape: bf16[32,32], index: 8, kind: input, shape index: {}]
  %s9 = inlined_call_operand.hbm [shape: f32[1,32], index: 9, kind: input, shape index: {}]
  %s10 = inlined_call_operand.vmem [shape: bf16[32,32], index: 10, kind: input, shape index: {}]
  %s11 = inlined_call_operand.hbm [shape: f32[1,32], index: 11, kind: input, shape index: {}]
  %s12 = inlined_call_operand.hbm [shape: f32[1,32], index: 12, kind: input, shape index: {}]
  %s13 = inlined_call_operand.hbm [shape: f32[1,32], index: 13, kind: input, shape index: {}]
  %s14 = inlined_call_operand.vmem [shape: bf16[32,128], index: 14, kind: input, shape index: {}]
  %s15 = inlined_call_operand.vmem [shape: f32[1,128], index: 15, kind: input, shape index: {}]
  %s16 = inlined_call_operand.vmem [shape: bf16[128,32], index: 16, kind: input, shape index: {}]
  %s17 = inlined_call_operand.vmem [shape: f32[1,32], index: 17, kind: input, shape index: {}]
  %s18 = inlined_call_operand.hbm [shape: f32[2,8,32], index: 18, kind: output, shape index: {}]
  %s19 = sld [smem:[#allocation0]]
  $region137: #{tpu_custom_call.1} parent=0
    _
  %s21 = ssub.s32 1, %s19
  %s22 = scalar_select 0, %s21, %s19
  $region1: #{tpu_custom_call.1} parent=0
    #allocation5 [shape = 'u8[512]{0}', space=vmem, size = 0x400, scoped, tag = 'input window, operand 3, single buffered']
    #allocation6 [shape = 's32[2]{0}', space=sflag, size = 0x8, scoped, tag = 'scoped memory for tpu_custom_call.1']
    #allocation7 [shape = 's32[2]{0}', space=sflag, size = 0x8, scoped, tag = 'scoped memory for tpu_custom_call.1']
    #allocation8 [shape = 'u8[512]{0}', space=vmem, size = 0x400, scoped, tag = 'input window, operand 5, single buffered']
    #allocation9 [shape = 's32[1]{0}', space=sflag, size = 0x4, scoped, tag = 'scoped memory for tpu_custom_call.1']
    #allocation10 [shape = 'u8[512]{0}', space=vmem, size = 0x400, scoped, tag = 'input window, operand 7, single buffered']
    #allocation11 [shape = 'u8[512]{0}', space=vmem, size = 0x400, scoped, tag = 'input window, operand 9, single buffered']
    #allocation12 [shape = 's32[1]{0}', space=sflag, size = 0x4, scoped, tag = 'scoped memory for tpu_custom_call.1']
    #allocation13 [shape = 'u8[512]{0}', space=vmem, size = 0x400, scoped, tag = 'input window, operand 11, single buffered']
    #allocation14 [shape = 'u8[512]{0}', space=vmem, size = 0x400, scoped, tag = 'input window, operand 12, single buffered']
    #allocation15 [shape = 's32[1]{0}', space=sflag, size = 0x4, scoped, tag = 'scoped memory for tpu_custom_call.1']
    #allocation16 [shape = 'u8[512]{0}', space=vmem, size = 0x400, scoped, tag = 'input window, operand 13, single buffered']
    #allocation17 [shape = 'u8[8192]{0}', space=vmem, size = 0x2000, scoped, tag = 'output window, operand 0']
    %23 = vsyncpa [#allocation6], 0
    %24 = vsyncpa [#allocation9], 0
    %25 = vsyncpa [#allocation12], 0
    %26 = vsyncpa [#allocation15], 0
    %27 = vsyncpa [#allocation7], 0
    %s28 = scalar_lea.sflag [#allocation7], 1
    %29 = vsyncpa %s28, 0
    loop: start=0, step=1, limit=4
    $region2: #{tpu_custom_call.1} parent=1 // loop_pre_header
      _
    $region3: #{tpu_custom_call.1} parent=1 // loop_header
      %s31 = sphi 0, %s35
      %p32 = scmp.ge.s32.totalorder %s31, 4
      %s38 = sphi 0, %s50
      %s39 = sphi 0, %s46
      %s40 = sphi 0, %s38
      %s41 = sphi 0, %s39
      %s42 = sphi 0, %s40
      %s43 = sphi 0, %s41
      %s55 = sphi 0, %s57
      %s58 = sphi 0, %s55
      %s59 = sphi 0, %s58
      %s75 = sphi 0, %s59
      %s81 = sphi 0, %s83
      %s84 = sphi 0, %s81
      %s85 = sphi 0, %s84
      %s101 = sphi 0, %s85
      %s105 = sphi 0, %s105
      %s107 = sphi 0, %s105
      %s108 = sphi 0, %s107
      %s122 = sphi 0, %s108
      %s126 = sphi 0, %s126
      %s128 = sphi 0, %s126
      %s129 = sphi 0, %s128
      %s143 = sphi 0, %s129
      %s147 = sphi 0, %s147
      %s149 = sphi 0, %s147
      %s150 = sphi 0, %s149
      %s164 = sphi 0, %s150
      %s168 = sphi 0, %s168
      %s170 = sphi 0, %s168
      %s171 = sphi 0, %s170
      %s185 = sphi 0, %s171
      %s189 = sphi 0, %s189
      %s191 = sphi 0, %s189
      %s192 = sphi 0, %s191
      %s206 = sphi 0, %s192
      %s210 = sphi 0, %s210
      %s212 = sphi 0, %s210
      %s213 = sphi 0, %s212
      %s227 = sphi 0, %s213
      %s231 = sphi 0, %s231
      %s233 = sphi 0, %s231
      %s234 = sphi 0, %s233
      %s248 = sphi 0, %s234
      %s252 = sphi 0, %s252
      %s254 = sphi 0, %s252
      %s255 = sphi 0, %s254
      %s269 = sphi 0, %s255
      %s273 = sphi 0, %s273
      %s275 = sphi 0, %s273
      %s276 = sphi 0, %s275
      %s290 = sphi 0, %s276
      %s294 = sphi 0, %s294
      %s296 = sphi 0, %s294
      %s297 = sphi 0, %s296
      %s311 = sphi 0, %s297
      %s315 = sphi 0, %s315
      %s317 = sphi 0, %s315
      %s318 = sphi 0, %s317
      %s332 = sphi 0, %s318
      %s336 = sphi 0, %s336
      %s338 = sphi 0, %s336
      %s339 = sphi 0, %s338
      %s353 = sphi 0, %s339
      %s357 = sphi 0, %s357
      %s359 = sphi 0, %s357
      %s360 = sphi 0, %s359
      %s374 = sphi 0, %s360
      %s378 = sphi 0, %s378
      %s380 = sphi 0, %s378
      %s381 = sphi 0, %s380
      %s395 = sphi 0, %s381
      %s399 = sphi 0, %s399
      %s401 = sphi 0, %s399
      %s402 = sphi 0, %s401
      %s416 = sphi 0, %s402
      %s420 = sphi 0, %s420
      %s422 = sphi 0, %s420
      %s423 = sphi 0, %s422
      %s437 = sphi 0, %s423
      %s445 = sphi 0, %s447
      %s448 = sphi 0, %s445
      %s449 = sphi 0, %s448
      %s465 = sphi 0, %s449
    $region4: #{tpu_custom_call.1} parent=1 // loop_header_branch
      %34 = sbr.rel (%p32) target = $region8
    $region5: #{tpu_custom_call.1} parent=1 // loop_body
      %s36 = ssub.s32 %s31, 1
      %s37 = ssub.s32 %s31, 2
      %s44 = sadd.s32 1, %s39
      %p45 = scmp.ge.s32.totalorder %s44, 1
      %s46 = scalar_select %p45, 0, %s44
      %s47 = sadd.s32 1, %s38
      %s48 = scalar_select %p45, %s47, %s38
      %p49 = scmp.ge.s32.totalorder %s48, 2
      %s50 = scalar_select %p49, 0, %s48
      %s51 = ssub.s32 %s38, %s50
      %s52 = ssub.s32 %s39, %s46
      %s53 = sor.u32 %s51, %s52
      %p54 = scmp.eq.s32.totalorder %s53, 0
      %s56 = sadd.s32 %s55, 1
      %s57 = scalar_select %p54, %s55, %s56
      %p60 = pneg %p54
      %p61 = scmp.eq.s32.totalorder %s31, 1
      %p62 = por %p60, %p61
      %p63 = scmp.ne.s32.totalorder %s55, %s58
      %p64 = scmp.eq.s32.totalorder %s31, 0
      %p65 = por %p63, %p64
      %p66 = scmp.ne.s32.totalorder %s55, %s58
      %p67 = scmp.eq.s32.totalorder %s36, 1
      %p68 = por %p66, %p67
      %p69 = scmp.ne.s32.totalorder %s58, %s59
      %p70 = scmp.eq.s32.totalorder %s36, 0
      %p71 = por %p69, %p70
      %p72 = scmp.ne.s32.totalorder %s58, %s59
      %p73 = scmp.eq.s32.totalorder %s37, 1
      %p74 = por %p72, %p73
      %p76 = scmp.ne.s32.totalorder %s59, %s75
      %p77 = scmp.eq.s32.totalorder %s37, 0
      %p78 = por %p76, %p77
      %s79 = ssub.s32 %s38, %s50
      %p80 = scmp.eq.s32.totalorder %s79, 0
      %s82 = sadd.s32 %s81, 1
      %s83 = scalar_select %p80, %s81, %s82
      %p86 = pneg %p80
      %p87 = scmp.eq.s32.totalorder %s31, 1
      %p88 = por %p86, %p87
      %p89 = scmp.ne.s32.totalorder %s81, %s84
      %p90 = scmp.eq.s32.totalorder %s31, 0
      %p91 = por %p89, %p90
      %p92 = scmp.ne.s32.totalorder %s81, %s84
      %p93 = scmp.eq.s32.totalorder %s36, 1
      %p94 = por %p92, %p93
      %p95 = scmp.ne.s32.totalorder %s84, %s85
      %p96 = scmp.eq.s32.totalorder %s36, 0
      %p97 = por %p95, %p96
      %p98 = scmp.ne.s32.totalorder %s84, %s85
      %p99 = scmp.eq.s32.totalorder %s37, 1
      %p100 = por %p98, %p99
      %p102 = scmp.ne.s32.totalorder %s85, %s101
      %p103 = scmp.eq.s32.totalorder %s37, 0
      %p104 = por %p102, %p103
      %s106 = sadd.s32 %s105, 1
      %p109 = scmp.eq.s32.totalorder %s31, 1
      %p110 = scmp.ne.s32.totalorder %s105, %s107
      %p111 = scmp.eq.s32.totalorder %s31, 0
      %p112 = por %p110, %p111
      %p113 = scmp.ne.s32.totalorder %s105, %s107
      %p114 = scmp.eq.s32.totalorder %s36, 1
      %p115 = por %p113, %p114
      %p116 = scmp.ne.s32.totalorder %s107, %s108
      %p117 = scmp.eq.s32.totalorder %s36, 0
      %p118 = por %p116, %p117
      %p119 = scmp.ne.s32.totalorder %s107, %s108
      %p120 = scmp.eq.s32.totalorder %s37, 1
      %p121 = por %p119, %p120
      %p123 = scmp.ne.s32.totalorder %s108, %s122
      %p124 = scmp.eq.s32.totalorder %s37, 0
      %p125 = por %p123, %p124
      %s127 = sadd.s32 %s126, 1
      %p130 = scmp.eq.s32.totalorder %s31, 1
      %p131 = scmp.ne.s32.totalorder %s126, %s128
      %p132 = scmp.eq.s32.totalorder %s31, 0
      %p133 = por %p131, %p132
      %p134 = scmp.ne.s32.totalorder %s126, %s128
      %p135 = scmp.eq.s32.totalorder %s36, 1
      %p136 = por %p134, %p135
      %p137 = scmp.ne.s32.totalorder %s128, %s129
      %p138 = scmp.eq.s32.totalorder %s36, 0
      %p139 = por %p137, %p138
      %p140 = scmp.ne.s32.totalorder %s128, %s129
      %p141 = scmp.eq.s32.totalorder %s37, 1
      %p142 = por %p140, %p141
      %p144 = scmp.ne.s32.totalorder %s129, %s143
      %p145 = scmp.eq.s32.totalorder %s37, 0
      %p146 = por %p144, %p145
      %s148 = sadd.s32 %s147, 1
      %p151 = scmp.eq.s32.totalorder %s31, 1
      %p152 = scmp.ne.s32.totalorder %s147, %s149
      %p153 = scmp.eq.s32.totalorder %s31, 0
      %p154 = por %p152, %p153
      %p155 = scmp.ne.s32.totalorder %s147, %s149
      %p156 = scmp.eq.s32.totalorder %s36, 1
      %p157 = por %p155, %p156
      %p158 = scmp.ne.s32.totalorder %s149, %s150
      %p159 = scmp.eq.s32.totalorder %s36, 0
      %p160 = por %p158, %p159
      %p161 = scmp.ne.s32.totalorder %s149, %s150
      %p162 = scmp.eq.s32.totalorder %s37, 1
      %p163 = por %p161, %p162
      %p165 = scmp.ne.s32.totalorder %s150, %s164
      %p166 = scmp.eq.s32.totalorder %s37, 0
      %p167 = por %p165, %p166
      %s169 = sadd.s32 %s168, 1
      %p172 = scmp.eq.s32.totalorder %s31, 1
      %p173 = scmp.ne.s32.totalorder %s168, %s170
      %p174 = scmp.eq.s32.totalorder %s31, 0
      %p175 = por %p173, %p174
      %p176 = scmp.ne.s32.totalorder %s168, %s170
      %p177 = scmp.eq.s32.totalorder %s36, 1
      %p178 = por %p176, %p177
      %p179 = scmp.ne.s32.totalorder %s170, %s171
      %p180 = scmp.eq.s32.totalorder %s36, 0
      %p181 = por %p179, %p180
      %p182 = scmp.ne.s32.totalorder %s170, %s171
      %p183 = scmp.eq.s32.totalorder %s37, 1
      %p184 = por %p182, %p183
      %p186 = scmp.ne.s32.totalorder %s171, %s185
      %p187 = scmp.eq.s32.totalorder %s37, 0
      %p188 = por %p186, %p187
      %s190 = sadd.s32 %s189, 1
      %p193 = scmp.eq.s32.totalorder %s31, 1
      %p194 = scmp.ne.s32.totalorder %s189, %s191
      %p195 = scmp.eq.s32.totalorder %s31, 0
      %p196 = por %p194, %p195
      %p197 = scmp.ne.s32.totalorder %s189, %s191
      %p198 = scmp.eq.s32.totalorder %s36, 1
      %p199 = por %p197, %p198
      %p200 = scmp.ne.s32.totalorder %s191, %s192
      %p201 = scmp.eq.s32.totalorder %s36, 0
      %p202 = por %p200, %p201
      %p203 = scmp.ne.s32.totalorder %s191, %s192
      %p204 = scmp.eq.s32.totalorder %s37, 1
      %p205 = por %p203, %p204
      %p207 = scmp.ne.s32.totalorder %s192, %s206
      %p208 = scmp.eq.s32.totalorder %s37, 0
      %p209 = por %p207, %p208
      %s211 = sadd.s32 %s210, 1
      %p214 = scmp.eq.s32.totalorder %s31, 1
      %p215 = scmp.ne.s32.totalorder %s210, %s212
      %p216 = scmp.eq.s32.totalorder %s31, 0
      %p217 = por %p215, %p216
      %p218 = scmp.ne.s32.totalorder %s210, %s212
      %p219 = scmp.eq.s32.totalorder %s36, 1
      %p220 = por %p218, %p219
      %p221 = scmp.ne.s32.totalorder %s212, %s213
      %p222 = scmp.eq.s32.totalorder %s36, 0
      %p223 = por %p221, %p222
      %p224 = scmp.ne.s32.totalorder %s212, %s213
      %p225 = scmp.eq.s32.totalorder %s37, 1
      %p226 = por %p224, %p225
      %p228 = scmp.ne.s32.totalorder %s213, %s227
      %p229 = scmp.eq.s32.totalorder %s37, 0
      %p230 = por %p228, %p229
      %s232 = sadd.s32 %s231, 1
      %p235 = scmp.eq.s32.totalorder %s31, 1
      %p236 = scmp.ne.s32.totalorder %s231, %s233
      %p237 = scmp.eq.s32.totalorder %s31, 0
      %p238 = por %p236, %p237
      %p239 = scmp.ne.s32.totalorder %s231, %s233
      %p240 = scmp.eq.s32.totalorder %s36, 1
      %p241 = por %p239, %p240
      %p242 = scmp.ne.s32.totalorder %s233, %s234
      %p243 = scmp.eq.s32.totalorder %s36, 0
      %p244 = por %p242, %p243
      %p245 = scmp.ne.s32.totalorder %s233, %s234
      %p246 = scmp.eq.s32.totalorder %s37, 1
      %p247 = por %p245, %p246
      %p249 = scmp.ne.s32.totalorder %s234, %s248
      %p250 = scmp.eq.s32.totalorder %s37, 0
      %p251 = por %p249, %p250
      %s253 = sadd.s32 %s252, 1
      %p256 = scmp.eq.s32.totalorder %s31, 1
      %p257 = scmp.ne.s32.totalorder %s252, %s254
      %p258 = scmp.eq.s32.totalorder %s31, 0
      %p259 = por %p257, %p258
      %p260 = scmp.ne.s32.totalorder %s252, %s254
      %p261 = scmp.eq.s32.totalorder %s36, 1
      %p262 = por %p260, %p261
      %p263 = scmp.ne.s32.totalorder %s254, %s255
      %p264 = scmp.eq.s32.totalorder %s36, 0
      %p265 = por %p263, %p264
      %p266 = scmp.ne.s32.totalorder %s254, %s255
      %p267 = scmp.eq.s32.totalorder %s37, 1
      %p268 = por %p266, %p267
      %p270 = scmp.ne.s32.totalorder %s255, %s269
      %p271 = scmp.eq.s32.totalorder %s37, 0
      %p272 = por %p270, %p271
      %s274 = sadd.s32 %s273, 1
      %p277 = scmp.eq.s32.totalorder %s31, 1
      %p278 = scmp.ne.s32.totalorder %s273, %s275
      %p279 = scmp.eq.s32.totalorder %s31, 0
      %p280 = por %p278, %p279
      %p281 = scmp.ne.s32.totalorder %s273, %s275
      %p282 = scmp.eq.s32.totalorder %s36, 1
      %p283 = por %p281, %p282
      %p284 = scmp.ne.s32.totalorder %s275, %s276
      %p285 = scmp.eq.s32.totalorder %s36, 0
      %p286 = por %p284, %p285
      %p287 = scmp.ne.s32.totalorder %s275, %s276
      %p288 = scmp.eq.s32.totalorder %s37, 1
      %p289 = por %p287, %p288
      %p291 = scmp.ne.s32.totalorder %s276, %s290
      %p292 = scmp.eq.s32.totalorder %s37, 0
      %p293 = por %p291, %p292
      %s295 = sadd.s32 %s294, 1
      %p298 = scmp.eq.s32.totalorder %s31, 1
      %p299 = scmp.ne.s32.totalorder %s294, %s296
      %p300 = scmp.eq.s32.totalorder %s31, 0
      %p301 = por %p299, %p300
      %p302 = scmp.ne.s32.totalorder %s294, %s296
      %p303 = scmp.eq.s32.totalorder %s36, 1
      %p304 = por %p302, %p303
      %p305 = scmp.ne.s32.totalorder %s296, %s297
      %p306 = scmp.eq.s32.totalorder %s36, 0
      %p307 = por %p305, %p306
      %p308 = scmp.ne.s32.totalorder %s296, %s297
      %p309 = scmp.eq.s32.totalorder %s37, 1
      %p310 = por %p308, %p309
      %p312 = scmp.ne.s32.totalorder %s297, %s311
      %p313 = scmp.eq.s32.totalorder %s37, 0
      %p314 = por %p312, %p313
      %s316 = sadd.s32 %s315, 1
      %p319 = scmp.eq.s32.totalorder %s31, 1
      %p320 = scmp.ne.s32.totalorder %s315, %s317
      %p321 = scmp.eq.s32.totalorder %s31, 0
      %p322 = por %p320, %p321
      %p323 = scmp.ne.s32.totalorder %s315, %s317
      %p324 = scmp.eq.s32.totalorder %s36, 1
      %p325 = por %p323, %p324
      %p326 = scmp.ne.s32.totalorder %s317, %s318
      %p327 = scmp.eq.s32.totalorder %s36, 0
      %p328 = por %p326, %p327
      %p329 = scmp.ne.s32.totalorder %s317, %s318
      %p330 = scmp.eq.s32.totalorder %s37, 1
      %p331 = por %p329, %p330
      %p333 = scmp.ne.s32.totalorder %s318, %s332
      %p334 = scmp.eq.s32.totalorder %s37, 0
      %p335 = por %p333, %p334
      %s337 = sadd.s32 %s336, 1
      %p340 = scmp.eq.s32.totalorder %s31, 1
      %p341 = scmp.ne.s32.totalorder %s336, %s338
      %p342 = scmp.eq.s32.totalorder %s31, 0
      %p343 = por %p341, %p342
      %p344 = scmp.ne.s32.totalorder %s336, %s338
      %p345 = scmp.eq.s32.totalorder %s36, 1
      %p346 = por %p344, %p345
      %p347 = scmp.ne.s32.totalorder %s338, %s339
      %p348 = scmp.eq.s32.totalorder %s36, 0
      %p349 = por %p347, %p348
      %p350 = scmp.ne.s32.totalorder %s338, %s339
      %p351 = scmp.eq.s32.totalorder %s37, 1
      %p352 = por %p350, %p351
      %p354 = scmp.ne.s32.totalorder %s339, %s353
      %p355 = scmp.eq.s32.totalorder %s37, 0
      %p356 = por %p354, %p355
      %s358 = sadd.s32 %s357, 1
      %p361 = scmp.eq.s32.totalorder %s31, 1
      %p362 = scmp.ne.s32.totalorder %s357, %s359
      %p363 = scmp.eq.s32.totalorder %s31, 0
      %p364 = por %p362, %p363
      %p365 = scmp.ne.s32.totalorder %s357, %s359
      %p366 = scmp.eq.s32.totalorder %s36, 1
      %p367 = por %p365, %p366
      %p368 = scmp.ne.s32.totalorder %s359, %s360
      %p369 = scmp.eq.s32.totalorder %s36, 0
      %p370 = por %p368, %p369
      %p371 = scmp.ne.s32.totalorder %s359, %s360
      %p372 = scmp.eq.s32.totalorder %s37, 1
      %p373 = por %p371, %p372
      %p375 = scmp.ne.s32.totalorder %s360, %s374
      %p376 = scmp.eq.s32.totalorder %s37, 0
      %p377 = por %p375, %p376
      %s379 = sadd.s32 %s378, 1
      %p382 = scmp.eq.s32.totalorder %s31, 1
      %p383 = scmp.ne.s32.totalorder %s378, %s380
      %p384 = scmp.eq.s32.totalorder %s31, 0
      %p385 = por %p383, %p384
      %p386 = scmp.ne.s32.totalorder %s378, %s380
      %p387 = scmp.eq.s32.totalorder %s36, 1
      %p388 = por %p386, %p387
      %p389 = scmp.ne.s32.totalorder %s380, %s381
      %p390 = scmp.eq.s32.totalorder %s36, 0
      %p391 = por %p389, %p390
      %p392 = scmp.ne.s32.totalorder %s380, %s381
      %p393 = scmp.eq.s32.totalorder %s37, 1
      %p394 = por %p392, %p393
      %p396 = scmp.ne.s32.totalorder %s381, %s395
      %p397 = scmp.eq.s32.totalorder %s37, 0
      %p398 = por %p396, %p397
      %s400 = sadd.s32 %s399, 1
      %p403 = scmp.eq.s32.totalorder %s31, 1
      %p404 = scmp.ne.s32.totalorder %s399, %s401
      %p405 = scmp.eq.s32.totalorder %s31, 0
      %p406 = por %p404, %p405
      %p407 = scmp.ne.s32.totalorder %s399, %s401
      %p408 = scmp.eq.s32.totalorder %s36, 1
      %p409 = por %p407, %p408
      %p410 = scmp.ne.s32.totalorder %s401, %s402
      %p411 = scmp.eq.s32.totalorder %s36, 0
      %p412 = por %p410, %p411
      %p413 = scmp.ne.s32.totalorder %s401, %s402
      %p414 = scmp.eq.s32.totalorder %s37, 1
      %p415 = por %p413, %p414
      %p417 = scmp.ne.s32.totalorder %s402, %s416
      %p418 = scmp.eq.s32.totalorder %s37, 0
      %p419 = por %p417, %p418
      %s421 = sadd.s32 %s420, 1
      %p424 = scmp.eq.s32.totalorder %s31, 1
      %p425 = scmp.ne.s32.totalorder %s420, %s422
      %p426 = scmp.eq.s32.totalorder %s31, 0
      %p427 = por %p425, %p426
      %p428 = scmp.ne.s32.totalorder %s420, %s422
      %p429 = scmp.eq.s32.totalorder %s36, 1
      %p430 = por %p428, %p429
      %p431 = scmp.ne.s32.totalorder %s422, %s423
      %p432 = scmp.eq.s32.totalorder %s36, 0
      %p433 = por %p431, %p432
      %p434 = scmp.ne.s32.totalorder %s422, %s423
      %p435 = scmp.eq.s32.totalorder %s37, 1
      %p436 = por %p434, %p435
      %p438 = scmp.ne.s32.totalorder %s423, %s437
      %p439 = scmp.eq.s32.totalorder %s37, 0
      %p440 = por %p438, %p439
      %s441 = ssub.s32 %s38, %s50
      %s442 = ssub.s32 %s39, %s46
      %s443 = sor.u32 %s441, %s442
      %p444 = scmp.eq.s32.totalorder %s443, 0
      %s446 = sadd.s32 %s445, 1
      %s447 = scalar_select %p444, %s445, %s446
      %p450 = pneg %p444
      %p451 = scmp.eq.s32.totalorder %s31, 1
      %p452 = por %p450, %p451
      %p453 = scmp.ne.s32.totalorder %s445, %s448
      %p454 = scmp.eq.s32.totalorder %s31, 0
      %p455 = por %p453, %p454
      %p456 = scmp.ne.s32.totalorder %s445, %s448
      %p457 = scmp.eq.s32.totalorder %s36, 1
      %p458 = por %p456, %p457
      %p459 = scmp.ne.s32.totalorder %s448, %s449
      %p460 = scmp.eq.s32.totalorder %s36, 0
      %p461 = por %p459, %p460
      %p462 = scmp.ne.s32.totalorder %s448, %s449
      %p463 = scmp.eq.s32.totalorder %s37, 1
      %p464 = por %p462, %p463
      %p466 = scmp.ne.s32.totalorder %s449, %s465
      %p467 = scmp.eq.s32.totalorder %s37, 0
      %p468 = por %p466, %p467
      %p469 = scmp.le.s32.totalorder 1, %s31
      %p470 = scmp.lt.s32.totalorder %s31, 3
      %p471 = pnand %p469, %p470
      %p472 = pneg %p471
      // Predicated region
      $region9: #{tpu_custom_call.1} parent=5 // pred_check
        _
      $region10: #{tpu_custom_call.1} parent=5 // pred_check_branch
        %474 = sbr.rel (%p471) target = $region12
      $region11: #{tpu_custom_call.1} parent=5 // pred_region
        %s475 = ssub.s32 %s31, 1
        // Predicated region
        $region13: #{tpu_custom_call.1} parent=11 // pred_check
          %p476 = pneg %p118
        $region14: #{tpu_custom_call.1} parent=11 // pred_check_branch
          %478 = sbr.rel (%p476) target = $region16
        $region15: #{tpu_custom_call.1} parent=11 // pred_region
          _
        $region16: #{tpu_custom_call.1} parent=11 // pred_fallthru
          _
        // Predicated region
        $region17: #{tpu_custom_call.1} parent=11 // pred_check
          %p479 = pneg %p139
        $region18: #{tpu_custom_call.1} parent=11 // pred_check_branch
          %481 = sbr.rel (%p479) target = $region20
        $region19: #{tpu_custom_call.1} parent=11 // pred_region
          %s483 = ssub.s32 16, 16
          %484 = vsyncadd [#allocation6], %s483
          %s486 = sshll.u32 [#allocation5], 4
          %s487 = int_to_ptr.vmem [resolvable:$true] %s486
          %489 = dma.hbm_to_vmem [thread:$0]  %s3, 16, %s487, [#allocation6]
        $region20: #{tpu_custom_call.1} parent=11 // pred_fallthru
          _
        // Predicated region
        $region21: #{tpu_custom_call.1} parent=11 // pred_check
          %p490 = pneg %p160
        $region22: #{tpu_custom_call.1} parent=11 // pred_check_branch
          %492 = sbr.rel (%p490) target = $region24
        $region23: #{tpu_custom_call.1} parent=11 // pred_region
          _
        $region24: #{tpu_custom_call.1} parent=11 // pred_fallthru
          _
        // Predicated region
        $region25: #{tpu_custom_call.1} parent=11 // pred_check
          %p493 = pneg %p181
        $region26: #{tpu_custom_call.1} parent=11 // pred_check_branch
          %495 = sbr.rel (%p493) target = $region28
        $region27: #{tpu_custom_call.1} parent=11 // pred_region
          %s497 = ssub.s32 16, 16
          %498 = vsyncadd [#allocation9], %s497
          %s500 = sshll.u32 [#allocation8], 4
          %s501 = int_to_ptr.vmem [resolvable:$true] %s500
          %503 = dma.hbm_to_vmem [thread:$0]  %s5, 16, %s501, [#allocation9]
        $region28: #{tpu_custom_call.1} parent=11 // pred_fallthru
          _
        // Predicated region
        $region29: #{tpu_custom_call.1} parent=11 // pred_check
          %p504 = pneg %p202
        $region30: #{tpu_custom_call.1} parent=11 // pred_check_branch
          %506 = sbr.rel (%p504) target = $region32
        $region31: #{tpu_custom_call.1} parent=11 // pred_region
          _
        $region32: #{tpu_custom_call.1} parent=11 // pred_fallthru
          _
        // Predicated region
        $region33: #{tpu_custom_call.1} parent=11 // pred_check
          %p507 = pneg %p223
        $region34: #{tpu_custom_call.1} parent=11 // pred_check_branch
          %509 = sbr.rel (%p507) target = $region36
        $region35: #{tpu_custom_call.1} parent=11 // pred_region
          %s511 = ssub.s32 16, 16
          %512 = vsyncadd [#allocation9], %s511
          %s514 = sshll.u32 [#allocation10], 4
          %s515 = int_to_ptr.vmem [resolvable:$true] %s514
          %517 = dma.hbm_to_vmem [thread:$0]  %s7, 16, %s515, [#allocation9]
        $region36: #{tpu_custom_call.1} parent=11 // pred_fallthru
          _
        // Predicated region
        $region37: #{tpu_custom_call.1} parent=11 // pred_check
          %p518 = pneg %p244
        $region38: #{tpu_custom_call.1} parent=11 // pred_check_branch
          %520 = sbr.rel (%p518) target = $region40
        $region39: #{tpu_custom_call.1} parent=11 // pred_region
          _
        $region40: #{tpu_custom_call.1} parent=11 // pred_fallthru
          _
        // Predicated region
        $region41: #{tpu_custom_call.1} parent=11 // pred_check
          %p521 = pneg %p265
        $region42: #{tpu_custom_call.1} parent=11 // pred_check_branch
          %523 = sbr.rel (%p521) target = $region44
        $region43: #{tpu_custom_call.1} parent=11 // pred_region
          %s525 = ssub.s32 16, 16
          %526 = vsyncadd [#allocation12], %s525
          %s528 = sshll.u32 [#allocation11], 4
          %s529 = int_to_ptr.vmem [resolvable:$true] %s528
          %531 = dma.hbm_to_vmem [thread:$0]  %s9, 16, %s529, [#allocation12]
        $region44: #{tpu_custom_call.1} parent=11 // pred_fallthru
          _
        // Predicated region
        $region45: #{tpu_custom_call.1} parent=11 // pred_check
          %p532 = pneg %p286
        $region46: #{tpu_custom_call.1} parent=11 // pred_check_branch
          %534 = sbr.rel (%p532) target = $region48
        $region47: #{tpu_custom_call.1} parent=11 // pred_region
          _
        $region48: #{tpu_custom_call.1} parent=11 // pred_fallthru
          _
        // Predicated region
        $region49: #{tpu_custom_call.1} parent=11 // pred_check
          %p535 = pneg %p307
        $region50: #{tpu_custom_call.1} parent=11 // pred_check_branch
          %537 = sbr.rel (%p535) target = $region52
        $region51: #{tpu_custom_call.1} parent=11 // pred_region
          %s539 = ssub.s32 16, 16
          %540 = vsyncadd [#allocation12], %s539
          %s542 = sshll.u32 [#allocation13], 4
          %s543 = int_to_ptr.vmem [resolvable:$true] %s542
          %545 = dma.hbm_to_vmem [thread:$0]  %s11, 16, %s543, [#allocation12]
        $region52: #{tpu_custom_call.1} parent=11 // pred_fallthru
          _
        // Predicated region
        $region53: #{tpu_custom_call.1} parent=11 // pred_check
          %p546 = pneg %p328
        $region54: #{tpu_custom_call.1} parent=11 // pred_check_branch
          %548 = sbr.rel (%p546) target = $region56
        $region55: #{tpu_custom_call.1} parent=11 // pred_region
          %s550 = ssub.s32 16, 16
          %551 = vsyncadd [#allocation15], %s550
          %s553 = sshll.u32 [#allocation14], 4
          %s554 = int_to_ptr.vmem [resolvable:$true] %s553
          %556 = dma.hbm_to_vmem [thread:$0]  %s12, 16, %s554, [#allocation15]
        $region56: #{tpu_custom_call.1} parent=11 // pred_fallthru
          _
        // Predicated region
        $region57: #{tpu_custom_call.1} parent=11 // pred_check
          %p557 = pneg %p349
        $region58: #{tpu_custom_call.1} parent=11 // pred_check_branch
          %559 = sbr.rel (%p557) target = $region60
        $region59: #{tpu_custom_call.1} parent=11 // pred_region
          %s561 = ssub.s32 16, 16
          %562 = vsyncadd [#allocation15], %s561
          %s564 = sshll.u32 [#allocation16], 4
          %s565 = int_to_ptr.vmem [resolvable:$true] %s564
          %567 = dma.hbm_to_vmem [thread:$0]  %s13, 16, %s565, [#allocation15]
        $region60: #{tpu_custom_call.1} parent=11 // pred_fallthru
          _
        // Predicated region
        $region61: #{tpu_custom_call.1} parent=11 // pred_check
          %p568 = pneg %p370
        $region62: #{tpu_custom_call.1} parent=11 // pred_check_branch
          %570 = sbr.rel (%p568) target = $region64
        $region63: #{tpu_custom_call.1} parent=11 // pred_region
          _
        $region64: #{tpu_custom_call.1} parent=11 // pred_fallthru
          _
        // Predicated region
        $region65: #{tpu_custom_call.1} parent=11 // pred_check
          %p571 = pneg %p391
        $region66: #{tpu_custom_call.1} parent=11 // pred_check_branch
          %573 = sbr.rel (%p571) target = $region68
        $region67: #{tpu_custom_call.1} parent=11 // pred_region
          _
        $region68: #{tpu_custom_call.1} parent=11 // pred_fallthru
          _
        // Predicated region
        $region69: #{tpu_custom_call.1} parent=11 // pred_check
          %p574 = pneg %p412
        $region70: #{tpu_custom_call.1} parent=11 // pred_check_branch
          %576 = sbr.rel (%p574) target = $region72
        $region71: #{tpu_custom_call.1} parent=11 // pred_region
          _
        $region72: #{tpu_custom_call.1} parent=11 // pred_fallthru
          _
        // Predicated region
        $region73: #{tpu_custom_call.1} parent=11 // pred_check
          %p577 = pneg %p433
        $region74: #{tpu_custom_call.1} parent=11 // pred_check_branch
          %579 = sbr.rel (%p577) target = $region76
        $region75: #{tpu_custom_call.1} parent=11 // pred_region
          _
        $region76: #{tpu_custom_call.1} parent=11 // pred_fallthru
          _
      $region12: #{tpu_custom_call.1} parent=5 // pred_fallthru
        _
      %p580 = scmp.lt.s32.totalorder %s31, 2
      // Predicated region
      $region77: #{tpu_custom_call.1} parent=5 // pred_check
        %p581 = pneg %p580
      $region78: #{tpu_custom_call.1} parent=5 // pred_check_branch
        %583 = sbr.rel (%p581) target = $region80
      $region79: #{tpu_custom_call.1} parent=5 // pred_region
        // Predicated region
        $region81: #{tpu_custom_call.1} parent=79 // pred_check
          %p584 = pneg %p65
        $region82: #{tpu_custom_call.1} parent=79 // pred_check_branch
          %586 = sbr.rel (%p584) target = $region84
        $region83: #{tpu_custom_call.1} parent=79 // pred_region
          %p587 = scmp.lt.s32.totalorder %s38, 1
          %s588 = scalar_select %p587, %s38, 1
          %p589 = scmp.lt.s32.totalorder %s39, 0
          %s590 = scalar_select %p589, %s39, 0
          %s591 = sadd.s32 %s590, %s588
          %s592 = smul.addr %s591, 8
          %s593 = scalar_lea.vmem %s0, %s592
        $region84: #{tpu_custom_call.1} parent=79 // pred_fallthru
          _
        // Predicated region
        $region85: #{tpu_custom_call.1} parent=79 // pred_check
          %p594 = pneg %p91
        $region86: #{tpu_custom_call.1} parent=79 // pred_check_branch
          %596 = sbr.rel (%p594) target = $region88
        $region87: #{tpu_custom_call.1} parent=79 // pred_region
          %p597 = scmp.lt.s32.totalorder %s38, 1
          %s598 = scalar_select %p597, %s38, 1
          %s599 = smul.addr %s598, 8
          %s600 = scalar_lea.vmem %s1, %s599
        $region88: #{tpu_custom_call.1} parent=79 // pred_fallthru
          _
      $region80: #{tpu_custom_call.1} parent=5 // pred_fallthru
        _
      %p601 = scmp.le.s32.totalorder 1, %s31
      %p602 = scmp.lt.s32.totalorder %s31, 3
      %p603 = pnand %p601, %p602
      %p604 = pneg %p603
      // Predicated region
      $region89: #{tpu_custom_call.1} parent=5 // pred_check
        _
      $region90: #{tpu_custom_call.1} parent=5 // pred_check_branch
        %606 = sbr.rel (%p603) target = $region92
      $region91: #{tpu_custom_call.1} parent=5 // pred_region
        %s607 = ssub.s32 %s31, 1
        // Predicated region
        $region93: #{tpu_custom_call.1} parent=91 // pred_check
          %p608 = pneg %p139
        $region94: #{tpu_custom_call.1} parent=91 // pred_check_branch
          %610 = sbr.rel (%p608) target = $region96
        $region95: #{tpu_custom_call.1} parent=91 // pred_region
          %611 = dma.done [#allocation6], 16
        $region96: #{tpu_custom_call.1} parent=91 // pred_fallthru
          _
        // Predicated region
        $region97: #{tpu_custom_call.1} parent=91 // pred_check
          %p612 = pneg %p181
        $region98: #{tpu_custom_call.1} parent=91 // pred_check_branch
          %614 = sbr.rel (%p612) target = $region100
        $region99: #{tpu_custom_call.1} parent=91 // pred_region
          %615 = dma.done [#allocation9], 16
        $region100: #{tpu_custom_call.1} parent=91 // pred_fallthru
          _
        // Predicated region
        $region101: #{tpu_custom_call.1} parent=91 // pred_check
          %p616 = pneg %p223
        $region102: #{tpu_custom_call.1} parent=91 // pred_check_branch
          %618 = sbr.rel (%p616) target = $region104
        $region103: #{tpu_custom_call.1} parent=91 // pred_region
          %619 = dma.done [#allocation9], 16
        $region104: #{tpu_custom_call.1} parent=91 // pred_fallthru
          _
        // Predicated region
        $region105: #{tpu_custom_call.1} parent=91 // pred_check
          %p620 = pneg %p265
        $region106: #{tpu_custom_call.1} parent=91 // pred_check_branch
          %622 = sbr.rel (%p620) target = $region108
        $region107: #{tpu_custom_call.1} parent=91 // pred_region
          %623 = dma.done [#allocation12], 16
        $region108: #{tpu_custom_call.1} parent=91 // pred_fallthru
          _
        // Predicated region
        $region109: #{tpu_custom_call.1} parent=91 // pred_check
          %p624 = pneg %p307
        $region110: #{tpu_custom_call.1} parent=91 // pred_check_branch
          %626 = sbr.rel (%p624) target = $region112
        $region111: #{tpu_custom_call.1} parent=91 // pred_region
          %627 = dma.done [#allocation12], 16
        $region112: #{tpu_custom_call.1} parent=91 // pred_fallthru
          _
        // Predicated region
        $region113: #{tpu_custom_call.1} parent=91 // pred_check
          %p628 = pneg %p328
        $region114: #{tpu_custom_call.1} parent=91 // pred_check_branch
          %630 = sbr.rel (%p628) target = $region116
        $region115: #{tpu_custom_call.1} parent=91 // pred_region
          %631 = dma.done [#allocation15], 16
        $region116: #{tpu_custom_call.1} parent=91 // pred_fallthru
          _
        // Predicated region
        $region117: #{tpu_custom_call.1} parent=91 // pred_check
          %p632 = pneg %p349
        $region118: #{tpu_custom_call.1} parent=91 // pred_check_branch
          %634 = sbr.rel (%p632) target = $region120
        $region119: #{tpu_custom_call.1} parent=91 // pred_region
          %635 = dma.done [#allocation15], 16
        $region120: #{tpu_custom_call.1} parent=91 // pred_fallthru
          _
        %p636 = scmp.lt.s32.totalorder %s40, 1
        %s637 = scalar_select %p636, %s40, 1
        %p638 = scmp.lt.s32.totalorder %s41, 0
        %s639 = scalar_select %p638, %s41, 0
        %s640 = sadd.s32 %s639, %s637
        %s641 = smul.addr %s640, 8
        %s642 = scalar_lea.vmem %s0, %s641
        %p643 = pneg %p71
        %p644 = pneg %p68
        %p645 = scmp.lt.s32.totalorder %s40, 1
        %s646 = scalar_select %p645, %s40, 1
        %s647 = smul.addr %s646, 8
        %s648 = scalar_lea.vmem %s1, %s647
        %p649 = pneg %p97
        %p650 = pneg %p94
        %p651 = pneg %p118
        %p652 = pneg %p115
        %p653 = pneg %p139
        %p654 = pneg %p136
        %p655 = pneg %p160
        %p656 = pneg %p157
        %p657 = pneg %p181
        %p658 = pneg %p178
        %p659 = pneg %p202
        %p660 = pneg %p199
        %p661 = pneg %p223
        %p662 = pneg %p220
        %p663 = pneg %p244
        %p664 = pneg %p241
        %p665 = pneg %p265
        %p666 = pneg %p262
        %p667 = pneg %p286
        %p668 = pneg %p283
        %p669 = pneg %p307
        %p670 = pneg %p304
        %p671 = pneg %p328
        %p672 = pneg %p325
        %p673 = pneg %p349
        %p674 = pneg %p346
        %p675 = pneg %p370
        %p676 = pneg %p367
        %p677 = pneg %p391
        %p678 = pneg %p388
        %p679 = pneg %p412
        %p680 = pneg %p409
        %p681 = pneg %p433
        %p682 = pneg %p430
        %p683 = pneg %p461
        %p684 = pneg %p458
        %s685 = sand.u32 %s448, 1
        %s686 = scalar_lea.sflag [#allocation7], %s685
        %s687 = sand.u32 %s448, 1
        %s688 = smul.addr %s687, 8
        %s689 = scalar_lea.vmem [#allocation17], %s688
        %p690 = scmp.lt.s32.totalorder %s40, 1
        %s691 = scalar_select %p690, %s40, 1
        %p692 = scmp.lt.s32.totalorder %s41, 0
        %s693 = scalar_select %p692, %s41, 0
        %s694 = sadd.s32 %s693, %s691
        %s695 = smul.addr %s694, 8
        %s696 = scalar_lea.vmem %s0, %s695
        %p697 = scmp.lt.s32.totalorder %s40, 1
        %s698 = scalar_select %p697, %s40, 1
        %s699 = smul.addr %s698, 8
        %s700 = scalar_lea.vmem %s1, %s699
        %p702 = scmp.eq.s32.totalorder %s41, 0
        // Predicated region
        $region121: #{tpu_custom_call.1} parent=91 // pred_check
          %p703 = pneg %p702
        $region122: #{tpu_custom_call.1} parent=91 // pred_check_branch
          %705 = sbr.rel (%p703) target = $region124
        $region123: #{tpu_custom_call.1} parent=91 // pred_region
          %v706 = vld [vmem:[%s700] sm:$0xff]
          %vm707 = vcmask 261120
          %v708 = vsel %vm707, %v706, 0.0
          %709 = vadd.xlane.f32.xlu0 %v708
          %v710 = vpop.xlane.xlu0 %709
          %v711 = vrcp.pop 32.0
          %v712 = vmul.f32 %v710, %v711
          %v713 = vsub.f32 %v706, %v712
          %v714 = vmul.f32 %v713, %v713
          %v715 = vsel %vm707, %v714, 0.0
          %716 = vadd.xlane.f32.xlu0 %v715
          %v717 = vpop.xlane.xlu0 %716
          %v718 = vmul.f32 %v717, %v711
          %v719 = vadd.f32 %v718, 1e-05
          %v720 = vrsqrt.pop %v719
          %v721 = vmul.f32 %v713, %v720
          %v722 = vld [vmem:[%s2] sm:$0x1]
          %v724 = vlaneseq
          %v725 = vshrl.u32 %v724, 7
          %v726 = vsub.s32 0, %v725
          %v727 = vrot.slane %v722, %v726
          %v729 = vmul.f32 %v721, %v727
          %v730 = vld [vmem:[#allocation5] sm:$0x1]
          %v732 = vlaneseq
          %v733 = vshrl.u32 %v732, 7
          %v734 = vsub.s32 0, %v733
          %v735 = vrot.slane %v730, %v734
          %v737 = vadd.f32 %v729, %v735
          %v738 = vpack.c.bf16 %v737, %v737
          %v739 = vld [vmem:[%s6] sm:$0xf]
          %v740 = vld [vmem:[%s6 + $0x4] sm:$0xf]
          %v741 = vld [vmem:[%s6 + $0x8] sm:$0xf]
          %v742 = vld [vmem:[%s6 + $0xc] sm:$0xf]
          %v743 = vld [vmem:[#allocation10] sm:$0x1]
          %v745 = vlaneseq
          %v746 = vshrl.u32 %v745, 7
          %v747 = vsub.s32 0, %v746
          %v748 = vrot.slane %v743, %v747
          %v754 = vunpack.c.l.b16 %v739
          %v755 = vunpack.c.l.b16 %v740
          %v756 = vunpack.c.l.b16 %v741
          %v757 = vunpack.c.l.b16 %v742
          %v758 = vpack.c.b16 %v755, %v754
          %v759 = vpack.c.b16 %v757, %v756
          %v763 = vsel %vm707, %v738, 0
          %765 = vmatprep.subr.bf16.mxu0 0
          %766 = vmatpush1.bf16.msra.mxu0 %v758
          %767 = vmatprep.subr.bf16.mxu0 0
          %768 = vmatpush1.bf16.msra.mxu0 %v759
          %769 = vmatprep.subr.bf16.mxu0 0
          %770 = vmatpush1.bf16.msra.mxu0 0
          %771 = vmatprep.subr.bf16.mxu0 0
          %772 = vmatpush1.bf16.msra.mxu0 0
          %773 = vmatprep.subr.bf16.mxu0 0
          %774 = vmatpush1.bf16.msra.mxu0 0
          %775 = vmatprep.subr.bf16.mxu0 0
          %776 = vmatpush1.bf16.msra.mxu0 0
          %777 = vmatprep.subr.bf16.mxu0 0
          %778 = vmatpush1.bf16.msra.mxu0 0
          %779 = vmatprep.subr.bf16.mxu0 0
          %780 = vmatpush1.bf16.msra.mxu0 0
          %781 = vmatprep.subr.bf16.mxu0 0
          %782 = vmatpush1.bf16.msra.mxu0 0
          %783 = vmatprep.subr.bf16.mxu0 0
          %784 = vmatpush1.bf16.msra.mxu0 0
          %785 = vmatprep.subr.bf16.mxu0 0
          %786 = vmatpush1.bf16.msra.mxu0 0
          %787 = vmatprep.subr.bf16.mxu0 0
          %788 = vmatpush1.bf16.msra.mxu0 0
          %789 = vmatprep.subr.bf16.mxu0 0
          %790 = vmatpush1.bf16.msra.mxu0 0
          %791 = vmatprep.subr.bf16.mxu0 0
          %792 = vmatpush1.bf16.msra.mxu0 0
          %793 = vmatprep.subr.bf16.mxu0 0
          %794 = vmatpush1.bf16.msra.mxu0 0
          %795 = vmatprep.subr.bf16.mxu0 0
          %796 = vmatpush1.bf16.msra.mxu0 0
          %797 = vmatprep.mubr.bf16.mxu0 0
          %798 = vmatmul.mubr.bf16.gmra.mrb[0].mxu0 %v763
          %v799 = vpop.f32.mrb[0].mxu0
          %v800 = vadd.f32 %v748, %v799
          %v801 = vpop.f32.mrb[0].mxu0
          %v802 = vpop.f32.mrb[0].mxu0
          %v803 = vpop.f32.mrb[0].mxu0
          %804 = vdwg.mxu0
          %v805 = vpack.c.bf16 %v800, %v800
          %vm806 = vcmask 257024
          %807 = vst.msk [vmem:[#allocation2] sm:$0xf] %vm806, %v805
          %v808 = vld [vmem:[%s8] sm:$0xf]
          %v809 = vld [vmem:[%s8 + $0x4] sm:$0xf]
          %v810 = vld [vmem:[%s8 + $0x8] sm:$0xf]
          %v811 = vld [vmem:[%s8 + $0xc] sm:$0xf]
          %v812 = vld [vmem:[#allocation11] sm:$0x1]
          %v814 = vlaneseq
          %v815 = vshrl.u32 %v814, 7
          %v816 = vsub.s32 0, %v815
          %v817 = vrot.slane %v812, %v816
          %v823 = vunpack.c.l.b16 %v808
          %v824 = vunpack.c.l.b16 %v809
          %v825 = vunpack.c.l.b16 %v810
          %v826 = vunpack.c.l.b16 %v811
          %v827 = vpack.c.b16 %v824, %v823
          %v828 = vpack.c.b16 %v826, %v825
          %831 = vmatprep.subr.bf16.mxu0 0
          %832 = vmatpush1.bf16.msra.mxu0 %v827
          %833 = vmatprep.subr.bf16.mxu0 0
          %834 = vmatpush1.bf16.msra.mxu0 %v828
          %835 = vmatprep.subr.bf16.mxu0 0
          %836 = vmatpush1.bf16.msra.mxu0 0
          %837 = vmatprep.subr.bf16.mxu0 0
          %838 = vmatpush1.bf16.msra.mxu0 0
          %839 = vmatprep.subr.bf16.mxu0 0
          %840 = vmatpush1.bf16.msra.mxu0 0
          %841 = vmatprep.subr.bf16.mxu0 0
          %842 = vmatpush1.bf16.msra.mxu0 0
          %843 = vmatprep.subr.bf16.mxu0 0
          %844 = vmatpush1.bf16.msra.mxu0 0
          %845 = vmatprep.subr.bf16.mxu0 0
          %846 = vmatpush1.bf16.msra.mxu0 0
          %847 = vmatprep.subr.bf16.mxu0 0
          %848 = vmatpush1.bf16.msra.mxu0 0
          %849 = vmatprep.subr.bf16.mxu0 0
          %850 = vmatpush1.bf16.msra.mxu0 0
          %851 = vmatprep.subr.bf16.mxu0 0
          %852 = vmatpush1.bf16.msra.mxu0 0
          %853 = vmatprep.subr.bf16.mxu0 0
          %854 = vmatpush1.bf16.msra.mxu0 0
          %855 = vmatprep.subr.bf16.mxu0 0
          %856 = vmatpush1.bf16.msra.mxu0 0
          %857 = vmatprep.subr.bf16.mxu0 0
          %858 = vmatpush1.bf16.msra.mxu0 0
          %859 = vmatprep.subr.bf16.mxu0 0
          %860 = vmatpush1.bf16.msra.mxu0 0
          %861 = vmatprep.subr.bf16.mxu0 0
          %862 = vmatpush1.bf16.msra.mxu0 0
          %863 = vmatprep.mubr.bf16.mxu0 0
          %864 = vmatmul.mubr.bf16.gmra.mrb[0].mxu0 %v763
          %v865 = vpop.f32.mrb[0].mxu0
          %v866 = vadd.f32 %v817, %v865
          %v867 = vpop.f32.mrb[0].mxu0
          %v868 = vpop.f32.mrb[0].mxu0
          %v869 = vpop.f32.mrb[0].mxu0
          %870 = vdwg.mxu0
          %v871 = vpack.c.bf16 %v866, %v866
          %872 = vst.msk [vmem:[#allocation3] sm:$0xf] %vm806, %v871
        $region124: #{tpu_custom_call.1} parent=91 // pred_fallthru
          _
        %v873 = vld [vmem:[%s696] sm:$0xff]
        %vm874 = vcmask 261120
        %v875 = vsel %vm874, %v873, 0.0
        %876 = vadd.xlane.f32.xlu0 %v875
        %v877 = vpop.xlane.xlu0 %876
        %v878 = vrcp.pop 32.0
        %v879 = vmul.f32 %v877, %v878
        %v880 = vsub.f32 %v873, %v879
        %v881 = vmul.f32 %v880, %v880
        %v882 = vsel %vm874, %v881, 0.0
        %883 = vadd.xlane.f32.xlu0 %v882
        %v884 = vpop.xlane.xlu0 %883
        %v885 = vmul.f32 %v884, %v878
        %v886 = vadd.f32 %v885, 1e-05
        %v887 = vrsqrt.pop %v886
        %v888 = vmul.f32 %v880, %v887
        %v889 = vld [vmem:[%s2] sm:$0x1]
        %v891 = vlaneseq
        %v892 = vshrl.u32 %v891, 7
        %v893 = vsub.s32 0, %v892
        %v894 = vrot.slane %v889, %v893
        %v896 = vmul.f32 %v888, %v894
        %v897 = vld [vmem:[#allocation5] sm:$0x1]
        %v899 = vlaneseq
        %v900 = vshrl.u32 %v899, 7
        %v901 = vsub.s32 0, %v900
        %v902 = vrot.slane %v897, %v901
        %v904 = vadd.f32 %v896, %v902
        %v905 = vpack.c.bf16 %v904, %v904
        %v906 = vld [vmem:[%s4] sm:$0xf]
        %v907 = vld [vmem:[%s4 + $0x4] sm:$0xf]
        %v908 = vld [vmem:[%s4 + $0x8] sm:$0xf]
        %v909 = vld [vmem:[%s4 + $0xc] sm:$0xf]
        %v910 = vld [vmem:[#allocation8] sm:$0x1]
        %v912 = vlaneseq
        %v913 = vshrl.u32 %v912, 7
        %v914 = vsub.s32 0, %v913
        %v915 = vrot.slane %v910, %v914
        %v921 = vunpack.c.l.b16 %v906
        %v922 = vunpack.c.l.b16 %v907
        %v923 = vunpack.c.l.b16 %v908
        %v924 = vunpack.c.l.b16 %v909
        %v925 = vpack.c.b16 %v922, %v921
        %v926 = vpack.c.b16 %v924, %v923
        %v930 = vsel %vm874, %v905, 0
        %932 = vmatprep.subr.bf16.mxu0 0
        %933 = vmatpush1.bf16.msra.mxu0 %v925
        %934 = vmatprep.subr.bf16.mxu0 0
        %935 = vmatpush1.bf16.msra.mxu0 %v926
        %936 = vmatprep.subr.bf16.mxu0 0
        %937 = vmatpush1.bf16.msra.mxu0 0
        %938 = vmatprep.subr.bf16.mxu0 0
        %939 = vmatpush1.bf16.msra.mxu0 0
        %940 = vmatprep.subr.bf16.mxu0 0
        %941 = vmatpush1.bf16.msra.mxu0 0
        %942 = vmatprep.subr.bf16.mxu0 0
        %943 = vmatpush1.bf16.msra.mxu0 0
        %944 = vmatprep.subr.bf16.mxu0 0
        %945 = vmatpush1.bf16.msra.mxu0 0
        %946 = vmatprep.subr.bf16.mxu0 0
        %947 = vmatpush1.bf16.msra.mxu0 0
        %948 = vmatprep.subr.bf16.mxu0 0
        %949 = vmatpush1.bf16.msra.mxu0 0
        %950 = vmatprep.subr.bf16.mxu0 0
        %951 = vmatpush1.bf16.msra.mxu0 0
        %952 = vmatprep.subr.bf16.mxu0 0
        %953 = vmatpush1.bf16.msra.mxu0 0
        %954 = vmatprep.subr.bf16.mxu0 0
        %955 = vmatpush1.bf16.msra.mxu0 0
        %956 = vmatprep.subr.bf16.mxu0 0
        %957 = vmatpush1.bf16.msra.mxu0 0
        %958 = vmatprep.subr.bf16.mxu0 0
        %959 = vmatpush1.bf16.msra.mxu0 0
        %960 = vmatprep.subr.bf16.mxu0 0
        %961 = vmatpush1.bf16.msra.mxu0 0
        %962 = vmatprep.subr.bf16.mxu0 0
        %963 = vmatpush1.bf16.msra.mxu0 0
        %964 = vmatprep.mubr.bf16.mxu0 0
        %965 = vmatmul.mubr.bf16.gmra.mrb[0].mxu0 %v930
        %v966 = vpop.f32.mrb[0].mxu0
        %v967 = vadd.f32 %v915, %v966
        %v968 = vpop.f32.mrb[0].mxu0
        %v969 = vpop.f32.mrb[0].mxu0
        %v970 = vpop.f32.mrb[0].mxu0
        %971 = vdwg.mxu0
        %v972 = vpack.c.bf16 %v967, %v967
        %v973 = vld [vmem:[#allocation2] sm:$0xf]
        %v975 = vsel %vm874, %v972, 0
        %v978 = vsel %vm874, %v973, 0
        %980 = vmatprep.subr.bf16.mxu0 0
        %981 = vmatpush1.bf16.xpose.msra.mxu0 %v978
        %982 = vmatprep.subr.bf16.mxu0 0
        %983 = vmatpush1.bf16.xpose.msra.mxu0 0
        %984 = vmatprep.subr.bf16.mxu0 0
        %985 = vmatpush1.bf16.xpose.msra.mxu0 0
        %986 = vmatprep.subr.bf16.mxu0 0
        %987 = vmatpush1.bf16.xpose.msra.mxu0 0
        %988 = vmatprep.subr.bf16.mxu0 0
        %989 = vmatpush1.bf16.xpose.msra.mxu0 0
        %990 = vmatprep.subr.bf16.mxu0 0
        %991 = vmatpush1.bf16.xpose.msra.mxu0 0
        %992 = vmatprep.subr.bf16.mxu0 0
        %993 = vmatpush1.bf16.xpose.msra.mxu0 0
        %994 = vmatprep.subr.bf16.mxu0 0
        %995 = vmatpush1.bf16.xpose.msra.mxu0 0
        %996 = vmatprep.subr.bf16.mxu0 0
        %997 = vmatpush1.bf16.xpose.msra.mxu0 0
        %998 = vmatprep.subr.bf16.mxu0 0
        %999 = vmatpush1.bf16.xpose.msra.mxu0 0
        %1000 = vmatprep.subr.bf16.mxu0 0
        %1001 = vmatpush1.bf16.xpose.msra.mxu0 0
        %1002 = vmatprep.subr.bf16.mxu0 0
        %1003 = vmatpush1.bf16.xpose.msra.mxu0 0
        %1004 = vmatprep.subr.bf16.mxu0 0
        %1005 = vmatpush1.bf16.xpose.msra.mxu0 0
        %1006 = vmatprep.subr.bf16.mxu0 0
        %1007 = vmatpush1.bf16.xpose.msra.mxu0 0
        %1008 = vmatprep.subr.bf16.mxu0 0
        %1009 = vmatpush1.bf16.xpose.msra.mxu0 0
        %1010 = vmatprep.subr.bf16.mxu0 0
        %1011 = vmatpush1.bf16.xpose.msra.mxu0 0
        %1012 = vmatprep.mubr.bf16.mxu0 0
        %1013 = vmatmul.mubr.bf16.gmra.mrb[0].mxu0 %v975
        %v1014 = vpop.f32.mrb[0].mxu0
        %v1015 = vadd.f32 0.0, %v1014
        %v1016 = vpop.f32.mrb[0].mxu0
        %v1017 = vpop.f32.mrb[0].mxu0
        %v1018 = vpop.f32.mrb[0].mxu0
        %1019 = vdwg.mxu0
        %v1020 = vmul.f32 %v1015, 0.17677669
        %vm1021 = vcmask 64512
        %v1022 = vsel %vm1021, %v1020, -inf
        %1023 = vmax.xlane.f32.xlu0 %v1022
        %v1024 = vpop.xlane.xlu0 %1023
        %v1025 = vsub.f32 %v1020, %v1024
        %v1026 = vmul.f32 %v1025, 1.442695
        %v1027 = vpow.pop %v1026
        %v1028 = vsel %vm1021, %v1027, 0.0
        %1029 = vadd.xlane.f32.xlu0 %v1028
        %v1030 = vpop.xlane.xlu0 %1029
        %v1031 = vrcp.pop %v1030
        %v1032 = vmul.f32 %v1027, %v1031
        %v1033 = vpack.c.bf16 %v1032, %v1032
        %v1034 = vld [vmem:[#allocation3] sm:$0xf]
        %v1036 = vsel %vm1021, %v1033, 0
        %vm1038 = vcmask 1043456
        %v1040 = vsel %vm1038, %v1034, 0
        %1042 = vmatprep.subr.bf16.mxu0 0
        %1043 = vmatpush1.bf16.msra.mxu0 %v1040
        %1044 = vmatprep.subr.bf16.mxu0 0
        %1045 = vmatpush1.bf16.msra.mxu0 0
        %1046 = vmatprep.subr.bf16.mxu0 0
        %1047 = vmatpush1.bf16.msra.mxu0 0
        %1048 = vmatprep.subr.bf16.mxu0 0
        %1049 = vmatpush1.bf16.msra.mxu0 0
        %1050 = vmatprep.subr.bf16.mxu0 0
        %1051 = vmatpush1.bf16.msra.mxu0 0
        %1052 = vmatprep.subr.bf16.mxu0 0
        %1053 = vmatpush1.bf16.msra.mxu0 0
        %1054 = vmatprep.subr.bf16.mxu0 0
        %1055 = vmatpush1.bf16.msra.mxu0 0
        %1056 = vmatprep.subr.bf16.mxu0 0
        %1057 = vmatpush1.bf16.msra.mxu0 0
        %1058 = vmatprep.subr.bf16.mxu0 0
        %1059 = vmatpush1.bf16.msra.mxu0 0
        %1060 = vmatprep.subr.bf16.mxu0 0
        %1061 = vmatpush1.bf16.msra.mxu0 0
        %1062 = vmatprep.subr.bf16.mxu0 0
        %1063 = vmatpush1.bf16.msra.mxu0 0
        %1064 = vmatprep.subr.bf16.mxu0 0
        %1065 = vmatpush1.bf16.msra.mxu0 0
        %1066 = vmatprep.subr.bf16.mxu0 0
        %1067 = vmatpush1.bf16.msra.mxu0 0
        %1068 = vmatprep.subr.bf16.mxu0 0
        %1069 = vmatpush1.bf16.msra.mxu0 0
        %1070 = vmatprep.subr.bf16.mxu0 0
        %1071 = vmatpush1.bf16.msra.mxu0 0
        %1072 = vmatprep.subr.bf16.mxu0 0
        %1073 = vmatpush1.bf16.msra.mxu0 0
        %1074 = vmatprep.mubr.bf16.mxu0 0
        %1075 = vmatmul.mubr.bf16.gmra.mrb[0].mxu0 %v1036
        %v1076 = vpop.f32.mrb[0].mxu0
        %v1077 = vadd.f32 0.0, %v1076
        %v1078 = vpop.f32.mrb[0].mxu0
        %v1079 = vpop.f32.mrb[0].mxu0
        %v1080 = vpop.f32.mrb[0].mxu0
        %1081 = vdwg.mxu0
        %v1082 = vpack.c.bf16 %v1077, %v1077
        %vm1083 = vcmask 257024
        %1084 = vst.msk [vmem:[#allocation4] sm:$0xf] %vm1083, %v1082
        %v1085 = vld [vmem:[#allocation4] sm:$0xf]
        %v1086 = vld [vmem:[%s10] sm:$0xf]
        %v1087 = vld [vmem:[%s10 + $0x4] sm:$0xf]
        %v1088 = vld [vmem:[%s10 + $0x8] sm:$0xf]
        %v1089 = vld [vmem:[%s10 + $0xc] sm:$0xf]
        %v1090 = vld [vmem:[#allocation13] sm:$0x1]
        %v1092 = vlaneseq
        %v1093 = vshrl.u32 %v1092, 7
        %v1094 = vsub.s32 0, %v1093
        %v1095 = vrot.slane %v1090, %v1094
        %v1101 = vunpack.c.l.b16 %v1086
        %v1102 = vunpack.c.l.b16 %v1087
        %v1103 = vunpack.c.l.b16 %v1088
        %v1104 = vunpack.c.l.b16 %v1089
        %v1105 = vpack.c.b16 %v1102, %v1101
        %v1106 = vpack.c.b16 %v1104, %v1103
        %v1110 = vsel %vm874, %v1085, 0
        %1112 = vmatprep.subr.bf16.mxu0 0
        %1113 = vmatpush1.bf16.msra.mxu0 %v1105
        %1114 = vmatprep.subr.bf16.mxu0 0
        %1115 = vmatpush1.bf16.msra.mxu0 %v1106
        %1116 = vmatprep.subr.bf16.mxu0 0
        %1117 = vmatpush1.bf16.msra.mxu0 0
        %1118 = vmatprep.subr.bf16.mxu0 0
        %1119 = vmatpush1.bf16.msra.mxu0 0
        %1120 = vmatprep.subr.bf16.mxu0 0
        %1121 = vmatpush1.bf16.msra.mxu0 0
        %1122 = vmatprep.subr.bf16.mxu0 0
        %1123 = vmatpush1.bf16.msra.mxu0 0
        %1124 = vmatprep.subr.bf16.mxu0 0
        %1125 = vmatpush1.bf16.msra.mxu0 0
        %1126 = vmatprep.subr.bf16.mxu0 0
        %1127 = vmatpush1.bf16.msra.mxu0 0
        %1128 = vmatprep.subr.bf16.mxu0 0
        %1129 = vmatpush1.bf16.msra.mxu0 0
        %1130 = vmatprep.subr.bf16.mxu0 0
        %1131 = vmatpush1.bf16.msra.mxu0 0
        %1132 = vmatprep.subr.bf16.mxu0 0
        %1133 = vmatpush1.bf16.msra.mxu0 0
        %1134 = vmatprep.subr.bf16.mxu0 0
        %1135 = vmatpush1.bf16.msra.mxu0 0
        %1136 = vmatprep.subr.bf16.mxu0 0
        %1137 = vmatpush1.bf16.msra.mxu0 0
        %1138 = vmatprep.subr.bf16.mxu0 0
        %1139 = vmatpush1.bf16.msra.mxu0 0
        %1140 = vmatprep.subr.bf16.mxu0 0
        %1141 = vmatpush1.bf16.msra.mxu0 0
        %1142 = vmatprep.subr.bf16.mxu0 0
        %1143 = vmatpush1.bf16.msra.mxu0 0
        %1144 = vmatprep.mubr.bf16.mxu0 0
        %1145 = vmatmul.mubr.bf16.gmra.mrb[0].mxu0 %v1110
        %v1146 = vpop.f32.mrb[0].mxu0
        %v1147 = vadd.f32 %v1095, %v1146
        %v1148 = vpop.f32.mrb[0].mxu0
        %v1149 = vpop.f32.mrb[0].mxu0
        %v1150 = vpop.f32.mrb[0].mxu0
        %1151 = vdwg.mxu0
        %v1152 = vadd.f32 %v873, %v1147
        %v1153 = vsel %vm874, %v1152, 0.0
        %1154 = vadd.xlane.f32.xlu0 %v1153
        %v1155 = vpop.xlane.xlu0 %1154
        %v1156 = vmul.f32 %v1155, %v878
        %v1157 = vsub.f32 %v1152, %v1156
        %v1158 = vmul.f32 %v1157, %v1157
        %v1159 = vsel %vm874, %v1158, 0.0
        %1160 = vadd.xlane.f32.xlu0 %v1159
        %v1161 = vpop.xlane.xlu0 %1160
        %v1162 = vmul.f32 %v1161, %v878
        %v1163 = vadd.f32 %v1162, 1e-05
        %v1164 = vrsqrt.pop %v1163
        %v1165 = vmul.f32 %v1157, %v1164
        %v1166 = vld [vmem:[#allocation14] sm:$0x1]
        %v1168 = vlaneseq
        %v1169 = vshrl.u32 %v1168, 7
        %v1170 = vsub.s32 0, %v1169
        %v1171 = vrot.slane %v1166, %v1170
        %v1173 = vmul.f32 %v1165, %v1171
        %v1174 = vld [vmem:[#allocation16] sm:$0x1]
        %v1176 = vlaneseq
        %v1177 = vshrl.u32 %v1176, 7
        %v1178 = vsub.s32 0, %v1177
        %v1179 = vrot.slane %v1174, %v1178
        %v1181 = vadd.f32 %v1173, %v1179
        %v1182 = vpack.c.bf16 %v1181, %v1181
        %v1183 = vld [vmem:[%s14] sm:$0xf]
        %v1184 = vld [vmem:[%s14 + $0x4] sm:$0xf]
        %v1185 = vld [vmem:[%s14 + $0x8] sm:$0xf]
        %v1186 = vld [vmem:[%s14 + $0xc] sm:$0xf]
        %v1187 = vld [vmem:[%s15] sm:$0x1]
        %v1189 = vlaneseq
        %v1190 = vshrl.u32 %v1189, 7
        %v1191 = vsub.s32 0, %v1190
        %v1192 = vrot.slane %v1187, %v1191
        %v1198 = vunpack.c.l.b16 %v1183
        %v1199 = vunpack.c.l.b16 %v1184
        %v1200 = vunpack.c.l.b16 %v1185
        %v1201 = vunpack.c.l.b16 %v1186
        %v1202 = vpack.c.b16 %v1199, %v1198
        %v1203 = vpack.c.b16 %v1201, %v1200
        %v1207 = vsel %vm874, %v1182, 0
        %1209 = vmatprep.subr.bf16.mxu0 0
        %1210 = vmatpush1.bf16.msra.mxu0 %v1202
        %1211 = vmatprep.subr.bf16.mxu0 0
        %1212 = vmatpush1.bf16.msra.mxu0 %v1203
        %1213 = vmatprep.subr.bf16.mxu0 0
        %1214 = vmatpush1.bf16.msra.mxu0 0
        %1215 = vmatprep.subr.bf16.mxu0 0
        %1216 = vmatpush1.bf16.msra.mxu0 0
        %1217 = vmatprep.subr.bf16.mxu0 0
        %1218 = vmatpush1.bf16.msra.mxu0 0
        %1219 = vmatprep.subr.bf16.mxu0 0
        %1220 = vmatpush1.bf16.msra.mxu0 0
        %1221 = vmatprep.subr.bf16.mxu0 0
        %1222 = vmatpush1.bf16.msra.mxu0 0
        %1223 = vmatprep.subr.bf16.mxu0 0
        %1224 = vmatpush1.bf16.msra.mxu0 0
        %1225 = vmatprep.subr.bf16.mxu0 0
        %1226 = vmatpush1.bf16.msra.mxu0 0
        %1227 = vmatprep.subr.bf16.mxu0 0
        %1228 = vmatpush1.bf16.msra.mxu0 0
        %1229 = vmatprep.subr.bf16.mxu0 0
        %1230 = vmatpush1.bf16.msra.mxu0 0
        %1231 = vmatprep.subr.bf16.mxu0 0
        %1232 = vmatpush1.bf16.msra.mxu0 0
        %1233 = vmatprep.subr.bf16.mxu0 0
        %1234 = vmatpush1.bf16.msra.mxu0 0
        %1235 = vmatprep.subr.bf16.mxu0 0
        %1236 = vmatpush1.bf16.msra.mxu0 0
        %1237 = vmatprep.subr.bf16.mxu0 0
        %1238 = vmatpush1.bf16.msra.mxu0 0
        %1239 = vmatprep.subr.bf16.mxu0 0
        %1240 = vmatpush1.bf16.msra.mxu0 0
        %1241 = vmatprep.mubr.bf16.mxu0 0
        %1242 = vmatmul.mubr.bf16.gmra.mrb[0].mxu0 %v1207
        %v1243 = vpop.f32.mrb[0].mxu0
        %v1244 = vadd.f32 %v1192, %v1243
        %v1245 = vpop.f32.mrb[0].mxu0
        %v1246 = vpop.f32.mrb[0].mxu0
        %v1247 = vpop.f32.mrb[0].mxu0
        %1248 = vdwg.mxu0
        %v1249 = vmax.f32 %v1244, 0.0
        %v1250 = vpack.c.bf16 %v1249, %v1249
        %v1251 = vld [vmem:[%s16] sm:$0xf]
        %v1252 = vld [vmem:[%s16 + $0x4] sm:$0xf]
        %v1253 = vld [vmem:[%s16 + $0x8] sm:$0xf]
        %v1254 = vld [vmem:[%s16 + $0xc] sm:$0xf]
        %v1255 = vld [vmem:[%s16 + $0x10] sm:$0xf]
        %v1256 = vld [vmem:[%s16 + $0x14] sm:$0xf]
        %v1257 = vld [vmem:[%s16 + $0x18] sm:$0xf]
        %v1258 = vld [vmem:[%s16 + $0x1c] sm:$0xf]
        %v1259 = vld [vmem:[%s16 + $0x20] sm:$0xf]
        %v1260 = vld [vmem:[%s16 + $0x24] sm:$0xf]
        %v1261 = vld [vmem:[%s16 + $0x28] sm:$0xf]
        %v1262 = vld [vmem:[%s16 + $0x2c] sm:$0xf]
        %v1263 = vld [vmem:[%s16 + $0x30] sm:$0xf]
        %v1264 = vld [vmem:[%s16 + $0x34] sm:$0xf]
        %v1265 = vld [vmem:[%s16 + $0x38] sm:$0xf]
        %v1266 = vld [vmem:[%s16 + $0x3c] sm:$0xf]
        %v1267 = vld [vmem:[%s17] sm:$0x1]
        %v1269 = vlaneseq
        %v1270 = vshrl.u32 %v1269, 7
        %v1271 = vsub.s32 0, %v1270
        %v1272 = vrot.slane %v1267, %v1271
        %v1290 = vunpack.c.l.b16 %v1251
        %v1291 = vunpack.c.l.b16 %v1252
        %v1292 = vunpack.c.l.b16 %v1253
        %v1293 = vunpack.c.l.b16 %v1254
        %v1294 = vunpack.c.l.b16 %v1255
        %v1295 = vunpack.c.l.b16 %v1256
        %v1296 = vunpack.c.l.b16 %v1257
        %v1297 = vunpack.c.l.b16 %v1258
        %v1298 = vunpack.c.l.b16 %v1259
        %v1299 = vunpack.c.l.b16 %v1260
        %v1300 = vunpack.c.l.b16 %v1261
        %v1301 = vunpack.c.l.b16 %v1262
        %v1302 = vunpack.c.l.b16 %v1263
        %v1303 = vunpack.c.l.b16 %v1264
        %v1304 = vunpack.c.l.b16 %v1265
        %v1305 = vunpack.c.l.b16 %v1266
        %v1306 = vpack.c.b16 %v1291, %v1290
        %v1307 = vpack.c.b16 %v1293, %v1292
        %v1308 = vpack.c.b16 %v1295, %v1294
        %v1309 = vpack.c.b16 %v1297, %v1296
        %v1310 = vpack.c.b16 %v1299, %v1298
        %v1311 = vpack.c.b16 %v1301, %v1300
        %v1312 = vpack.c.b16 %v1303, %v1302
        %v1313 = vpack.c.b16 %v1305, %v1304
        %1322 = vmatprep.subr.bf16.mxu0 0
        %1323 = vmatpush1.bf16.msra.mxu0 %v1306
        %1324 = vmatprep.subr.bf16.mxu0 0
        %1325 = vmatpush1.bf16.msra.mxu0 %v1307
        %1326 = vmatprep.subr.bf16.mxu0 0
        %1327 = vmatpush1.bf16.msra.mxu0 %v1308
        %1328 = vmatprep.subr.bf16.mxu0 0
        %1329 = vmatpush1.bf16.msra.mxu0 %v1309
        %1330 = vmatprep.subr.bf16.mxu0 0
        %1331 = vmatpush1.bf16.msra.mxu0 %v1310
        %1332 = vmatprep.subr.bf16.mxu0 0
        %1333 = vmatpush1.bf16.msra.mxu0 %v1311
        %1334 = vmatprep.subr.bf16.mxu0 0
        %1335 = vmatpush1.bf16.msra.mxu0 %v1312
        %1336 = vmatprep.subr.bf16.mxu0 0
        %1337 = vmatpush1.bf16.msra.mxu0 %v1313
        %1338 = vmatprep.subr.bf16.mxu0 0
        %1339 = vmatpush1.bf16.msra.mxu0 0
        %1340 = vmatprep.subr.bf16.mxu0 0
        %1341 = vmatpush1.bf16.msra.mxu0 0
        %1342 = vmatprep.subr.bf16.mxu0 0
        %1343 = vmatpush1.bf16.msra.mxu0 0
        %1344 = vmatprep.subr.bf16.mxu0 0
        %1345 = vmatpush1.bf16.msra.mxu0 0
        %1346 = vmatprep.subr.bf16.mxu0 0
        %1347 = vmatpush1.bf16.msra.mxu0 0
        %1348 = vmatprep.subr.bf16.mxu0 0
        %1349 = vmatpush1.bf16.msra.mxu0 0
        %1350 = vmatprep.subr.bf16.mxu0 0
        %1351 = vmatpush1.bf16.msra.mxu0 0
        %1352 = vmatprep.subr.bf16.mxu0 0
        %1353 = vmatpush1.bf16.msra.mxu0 0
        %1354 = vmatprep.mubr.bf16.mxu0 0
        %1355 = vmatmul.mubr.bf16.gmra.mrb[0].mxu0 %v1250
        %v1356 = vpop.f32.mrb[0].mxu0
        %v1357 = vadd.f32 %v1272, %v1356
        %v1358 = vpop.f32.mrb[0].mxu0
        %v1359 = vpop.f32.mrb[0].mxu0
        %v1360 = vpop.f32.mrb[0].mxu0
        %1361 = vdwg.mxu0
        %v1362 = vadd.f32 %v1152, %v1357
        %1363 = vst.msk [vmem:[%s689] sm:$0xff] %vm874, %v1362
        %s1364 = sand.u32 %s448, 1
        %s1365 = scalar_lea.sflag [#allocation7], %s1364
        %s1366 = sand.u32 %s448, 1
        %s1367 = smul.addr %s1366, 8
        %s1368 = scalar_lea.vmem [#allocation17], %s1367
        // Predicated region
        $region125: #{tpu_custom_call.1} parent=91 // pred_check
          %p1369 = pneg %p458
        $region126: #{tpu_custom_call.1} parent=91 // pred_check_branch
          %1371 = sbr.rel (%p1369) target = $region128
        $region127: #{tpu_custom_call.1} parent=91 // pred_region
          %s1373 = ssub.s32 128, 128
          %1374 = vsyncadd %s1365, %s1373
          %s1375 = sadd.s32 %s41, %s40
          %s1376 = smul.addr %s1375, 128
          %s1377 = scalar_lea.hbm %s18, %s1376
          %s1379 = sshll.u32 %s1368, 4
          %s1380 = int_to_ptr.vmem [resolvable:$true] %s1379
          %1382 = dma.vmem_to_hbm [thread:$0]  %s1380, 128, %s1377, %s1365
        $region128: #{tpu_custom_call.1} parent=91 // pred_fallthru
          _
      $region92: #{tpu_custom_call.1} parent=5 // pred_fallthru
        _
      %p1383 = scmp.le.s32.totalorder 2, %s31
      // Predicated region
      $region129: #{tpu_custom_call.1} parent=5 // pred_check
        %p1384 = pneg %p1383
      $region130: #{tpu_custom_call.1} parent=5 // pred_check_branch
        %1386 = sbr.rel (%p1384) target = $region132
      $region131: #{tpu_custom_call.1} parent=5 // pred_region
        %s1387 = ssub.s32 %s31, 2
        // Predicated region
        $region133: #{tpu_custom_call.1} parent=131 // pred_check
          %p1388 = pneg %p464
        $region134: #{tpu_custom_call.1} parent=131 // pred_check_branch
          %1390 = sbr.rel (%p1388) target = $region136
        $region135: #{tpu_custom_call.1} parent=131 // pred_region
          %s1391 = sand.u32 %s449, 1
          %s1392 = scalar_lea.sflag [#allocation7], %s1391
          %s1393 = sand.u32 %s449, 1
          %s1394 = smul.addr %s1393, 8
          %s1395 = scalar_lea.vmem [#allocation17], %s1394
          %1396 = dma.done %s1392, 128
        $region136: #{tpu_custom_call.1} parent=131 // pred_fallthru
          _
      $region132: #{tpu_custom_call.1} parent=5 // pred_fallthru
        _
    $region6: #{tpu_custom_call.1} parent=1 // loop_footer
      %s35 = sadd.s32 1, %s31
    $region7: #{tpu_custom_call.1} parent=1 // loop_footer_branch
      %30 = sbr.rel target = $region3
    $region8: #{tpu_custom_call.1} parent=1 // loop_exit
      _
    %1397 = vsyncpa [#allocation6], 1
    %s1398 = scalar_lea.sflag [#allocation6], 1
    %1399 = vsyncpa %s1398, 1
    %1400 = vsyncpa [#allocation9], 1
    %1401 = vsyncpa [#allocation12], 1
    %1402 = vsyncpa [#allocation15], 1
    %1403 = vsyncpa [#allocation7], 1
    %s1404 = scalar_lea.sflag [#allocation7], 1
    %1405 = vsyncpa %s1404, 1

</llo_original>
